<compile_context>
chip_gen: v6e
topology: v6e:2x2x1
jax: 0.10.0
libtpu: 0.0.40
codegen_flags: <defaults>
</compile_context>

<pallas_src>
import jax
import jax.numpy as jnp
from jax.experimental import pallas as pl
from jax.experimental.pallas import tpu as pltpu

LANE = 128
SUBLANE = 8


def _round_up(n, m):
    return ((n + m - 1) // m) * m


def _cdiv(a, b):
    return (a + b - 1) // b


def _pad_cast(a, rows, cols, dtype):
    """ONE fused cast+pad pass (emits the compute dtype directly); no-op when
    the array is already in the target shape/dtype."""
    if a.shape == (rows, cols) and a.dtype == jnp.dtype(dtype):
        return a
    a = a.astype(dtype)
    pr, pc = rows - a.shape[0], cols - a.shape[1]
    if pr or pc:
        a = jnp.pad(a, ((0, pr), (0, pc)))
    return a


def _choose_block_b(B, max_block_b):
    """Batch tile: multiple of 8, >=2 grid steps when possible (v7x megacore),
    minimal batch padding, as large as max_block_b allows."""
    B8 = _round_up(B, SUBLANE)
    max_bb = max(SUBLANE, min(_round_up(max_block_b, SUBLANE), B8))
    if B8 <= SUBLANE:
        return SUBLANE
    steps = max(2, _cdiv(B8, max_bb))           # >=2 so both TCs get a step
    bb = _round_up(_cdiv(B, steps), SUBLANE)    # minimal padding for that count
    return min(bb, max_bb)


def _physical_vmem_bytes():
    try:
        return int(pltpu.get_tpu_info().vmem_capacity_bytes)
    except Exception:
        return 64 * 1024 * 1024  # conservative: v7x per-core VMEM


def mask_block_forward(x, h, params, *, block_b=512,
                       compute_dtype=jnp.bfloat16, out_dtype=None):
    """x: [B, input_dim], h: [B, hidden_dim] -> [B, output_dim].

    compute_dtype=jnp.float32 / out_dtype=jnp.float32 gives an f32 parity path
    for testing against the original PyTorch module.
    """
    B, input_dim = x.shape
    hidden_dim = h.shape[1]
    w1, b1, w2, b2, w3, gamma, beta = params
    hidden_rr = w1.shape[1]
    output_dim = w3.shape[1]
    out_dtype = compute_dtype if out_dtype is None else out_dtype

    # --- lane-pad feature dims to multiples of 128 (lane-dense loads/stores) ---
    in_pad = _round_up(input_dim, LANE)
    rr_pad = _round_up(hidden_rr, LANE)
    hid_pad = _round_up(hidden_dim, LANE)
    out_pad = _round_up(output_dim, LANE)

    # --- batch tile / grid ---
    bb = _choose_block_b(B, block_b)
    B_pad = _round_up(B, bb)
    grid = (B_pad // bb,)

    # --- host-side prep: single fused cast+pad per array, bf16 activations ---
    xp = _pad_cast(x, B_pad, in_pad, compute_dtype)
    hp = _pad_cast(h, B_pad, hid_pad, compute_dtype)
    w1p = _pad_cast(w1, in_pad, rr_pad, compute_dtype)
    w2p = _pad_cast(w2, rr_pad, hid_pad, compute_dtype)
    w3p = _pad_cast(w3, hid_pad, out_pad, compute_dtype)
    b1p = _pad_cast(b1, 1, rr_pad, jnp.float32)
    b2p = _pad_cast(b2, 1, hid_pad, jnp.float32)
    gp = _pad_cast(gamma, 1, out_pad, jnp.float32)
    btp = _pad_cast(beta, 1, out_pad, jnp.float32)
    lane_mask = (jnp.arange(out_pad) < output_dim).astype(jnp.float32)
    lane_mask = lane_mask.reshape(1, out_pad)

    inv_out = 1.0 / float(output_dim)
    eps = 1e-5

    def kernel(x_ref, h_ref, w1_ref, b1_ref, w2_ref, b2_ref, w3_ref,
               g_ref, bt_ref, msk_ref, o_ref):
        # --- mask_layer: Linear -> ReLU -> Linear (MXU, f32 accumulate) ---
        z1 = jnp.dot(x_ref[...], w1_ref[...], preferred_element_type=jnp.float32)
        z1 = jnp.maximum(z1 + b1_ref[...], 0.0)
        v_mask = jnp.dot(z1.astype(compute_dtype), w2_ref[...],
                         preferred_element_type=jnp.float32) + b2_ref[...]

        # --- gate + hidden Linear (no bias); gate in compute_dtype
        #     (bf16 VPU on v6e/v7x; Mosaic upcasts on v5e) ---
        u = v_mask.astype(compute_dtype) * h_ref[...]
        v = jnp.dot(u, w3_ref[...], preferred_element_type=jnp.float32)

        # --- LayerNorm in f32 over the REAL output_dim lanes.
        # Padded columns of W3 are zero, so padded lanes of v are exactly 0 and
        # do not bias the mean; the lane mask keeps them out of the variance
        # and zeroes the padded output lanes (gamma/beta padding is 0 anyway).
        mean = jnp.sum(v, axis=-1, keepdims=True) * inv_out
        diff = (v - mean) * msk_ref[...]
        var = jnp.sum(diff * diff, axis=-1, keepdims=True) * inv_out
        y = diff * jax.lax.rsqrt(var + eps) * g_ref[...] + bt_ref[...]

        # --- ReLU (Dropout is identity at inference) ---
        o_ref[...] = jnp.maximum(y, 0.0).astype(o_ref.dtype)

    row_map = lambda i: (i, 0)
    fixed_map = lambda i: (0, 0)
    const = dict(pipeline_mode=pl.Buffered(1))  # fetched once, single-buffered
    # TODO(synk): verify in the Mosaic/bundle dump that these fixed_map +
    # Buffered(1) constants are DMA'd only on step 0; if re-fetched per step,
    # switch them to memory_space=pl.ANY + one manual make_async_copy.

    # --- VMEM footprint estimate -> scoped limit, capped at physical VMEM ---
    w_itm = jnp.dtype(compute_dtype).itemsize
    est = ((in_pad * rr_pad + rr_pad * hid_pad + hid_pad * out_pad) * w_itm
           + (rr_pad + hid_pad + 3 * out_pad) * 4
           + 2 * bb * (in_pad + hid_pad) * w_itm                    # x, h (2-buf)
           + 2 * bb * out_pad * jnp.dtype(out_dtype).itemsize       # out (2-buf)
           + 6 * bb * max(rr_pad, hid_pad, out_pad) * 4)            # live temps
    vmem_limit = int(min(_physical_vmem_bytes(),
                         max(32 * 1024 * 1024, 2 * est)))

    y_padded = pl.pallas_call(
        kernel,
        out_shape=jax.ShapeDtypeStruct((B_pad, out_pad), out_dtype),
        grid_spec=pltpu.PrefetchScalarGridSpec(
            num_scalar_prefetch=0,
            grid=grid,
            in_specs=[
                pl.BlockSpec((bb, in_pad), row_map),                  # x tile
                pl.BlockSpec((bb, hid_pad), row_map),                 # h tile
                pl.BlockSpec((in_pad, rr_pad), fixed_map, **const),   # w1
                pl.BlockSpec((1, rr_pad), fixed_map, **const),        # b1
                pl.BlockSpec((rr_pad, hid_pad), fixed_map, **const),  # w2
                pl.BlockSpec((1, hid_pad), fixed_map, **const),       # b2
                pl.BlockSpec((hid_pad, out_pad), fixed_map, **const), # w3
                pl.BlockSpec((1, out_pad), fixed_map, **const),       # ln gamma
                pl.BlockSpec((1, out_pad), fixed_map, **const),       # ln beta
                pl.BlockSpec((1, out_pad), fixed_map, **const),       # lane mask
            ],
            out_specs=pl.BlockSpec((bb, out_pad), row_map),
        ),
        compiler_params=pltpu.CompilerParams(
            dimension_semantics=("parallel",),
            vmem_limit_bytes=vmem_limit),
    )(xp, hp, w1p, b1p, w2p, b2p, w3p, gp, btp, lane_mask)

    return y_padded[:B, :output_dim]


def init_params(key, input_dim, hidden_dim, output_dim, reduction_ratio=1):
    """Deterministic synthetic init (Kaiming-uniform-ish like nn.Linear)."""
    hidden_rr = int(hidden_dim * reduction_ratio)
    k1, k2, k3, k4, k5 = jax.random.split(key, 5)

    def lin(k, fan_in, fan_out):
        bound = 1.0 / jnp.sqrt(fan_in)
        return jax.random.uniform(k, (fan_in, fan_out), jnp.float32, -bound, bound)

    w1 = lin(k1, input_dim, hidden_rr)                       # [in, hidden*rr]
    b1 = jax.random.uniform(k2, (1, hidden_rr), jnp.float32,
                            -1.0 / jnp.sqrt(input_dim), 1.0 / jnp.sqrt(input_dim))
    w2 = lin(k3, hidden_rr, hidden_dim)                      # [hidden*rr, hidden]
    b2 = jax.random.uniform(k4, (1, hidden_dim), jnp.float32,
                            -1.0 / jnp.sqrt(hidden_rr), 1.0 / jnp.sqrt(hidden_rr))
    w3 = lin(k5, hidden_dim, output_dim)                     # [hidden, out], no bias
    gamma = jnp.ones((1, output_dim), jnp.float32)
    beta = jnp.zeros((1, output_dim), jnp.float32)
    return (w1, b1, w2, b2, w3, gamma, beta)


def reference_forward(x, h, params, compute_dtype=jnp.bfloat16):
    """Pure-JAX reference mirroring the kernel's bf16-matmul / f32-LN math."""
    w1, b1, w2, b2, w3, gamma, beta = params
    cd = compute_dtype
    z1 = jnp.dot(x.astype(cd), w1.astype(cd), preferred_element_type=jnp.float32)
    z1 = jnp.maximum(z1 + b1, 0.0)
    v_mask = jnp.dot(z1.astype(cd), w2.astype(cd),
                     preferred_element_type=jnp.float32) + b2
    u = v_mask.astype(cd) * h.astype(cd)
    v = jnp.dot(u, w3.astype(cd), preferred_element_type=jnp.float32)
    mean = jnp.mean(v, axis=-1, keepdims=True)
    var = jnp.mean((v - mean) ** 2, axis=-1, keepdims=True)
    y = (v - mean) * jax.lax.rsqrt(var + 1e-5) * gamma + beta
    return jnp.maximum(y, 0.0)


if __name__ == "__main__":
    # Small but non-trivial shapes: ragged batch (exercises batch-tile choice
    # -> bb=104, 2 parallel grid steps, 4% padding), non-128-multiple feature
    # dims (exercises lane padding + masked LayerNorm).
    B, input_dim, hidden_dim, output_dim = 200, 96, 64, 48

    key = jax.random.PRNGKey(0)
    kx, kh, kp = jax.random.split(key, 3)
    x = jax.random.normal(kx, (B, input_dim), jnp.float32)
    h = jax.random.normal(kh, (B, hidden_dim), jnp.float32)
    params = init_params(kp, input_dim, hidden_dim, output_dim, reduction_ratio=1)

    out = mask_block_forward(x, h, params)          # bf16 activations + output
    out = jax.block_until_ready(out)

    ref = reference_forward(x, h, params)
    assert out.shape == (B, output_dim)
    assert out.dtype == jnp.bfloat16
    err = float(jnp.max(jnp.abs(out.astype(jnp.float32) - ref)))
    assert err < 5e-2, f"mismatch vs reference: max abs err {err}"

    print("KERNEL_OK")
</pallas_src>

<mosaic_0001>
module attributes {stable_mosaic.version = 11 : i64} {
  func.func @kernel(%arg0: i32, %arg1: memref<104x128xbf16, #tpu.memory_space<vmem>>, %arg2: memref<104x128xbf16, #tpu.memory_space<vmem>>, %arg3: memref<128x128xbf16, #tpu.memory_space<vmem>>, %arg4: memref<1x128xf32, #tpu.memory_space<vmem>>, %arg5: memref<128x128xbf16, #tpu.memory_space<vmem>>, %arg6: memref<1x128xf32, #tpu.memory_space<vmem>>, %arg7: memref<128x128xbf16, #tpu.memory_space<vmem>>, %arg8: memref<1x128xf32, #tpu.memory_space<vmem>>, %arg9: memref<1x128xf32, #tpu.memory_space<vmem>>, %arg10: memref<1x128xf32, #tpu.memory_space<vmem>>, %arg11: memref<104x128xbf16, #tpu.memory_space<vmem>>) attributes {dimension_semantics = [#tpu.dimension_semantics<parallel>], iteration_bounds = array<i64: 2>, scalar_prefetch = 0 : i64, scratch_operands = 0 : i64, tpu.core_type = #tpu.core_type<tc>, window_params = [{transform_indices = @transform_0, window_bounds = array<i64: 104, 128>}, {transform_indices = @transform_1, window_bounds = array<i64: 104, 128>}, {pipeline_mode = #tpu.pipeline_mode<synchronous>, transform_indices = @transform_2, window_bounds = array<i64: 128, 128>}, {pipeline_mode = #tpu.pipeline_mode<synchronous>, transform_indices = @transform_3, window_bounds = array<i64: 1, 128>}, {pipeline_mode = #tpu.pipeline_mode<synchronous>, transform_indices = @transform_4, window_bounds = array<i64: 128, 128>}, {pipeline_mode = #tpu.pipeline_mode<synchronous>, transform_indices = @transform_5, window_bounds = array<i64: 1, 128>}, {pipeline_mode = #tpu.pipeline_mode<synchronous>, transform_indices = @transform_6, window_bounds = array<i64: 128, 128>}, {pipeline_mode = #tpu.pipeline_mode<synchronous>, transform_indices = @transform_7, window_bounds = array<i64: 1, 128>}, {pipeline_mode = #tpu.pipeline_mode<synchronous>, transform_indices = @transform_8, window_bounds = array<i64: 1, 128>}, {pipeline_mode = #tpu.pipeline_mode<synchronous>, transform_indices = @transform_9, window_bounds = array<i64: 1, 128>}, {transform_indices = @transform_10, window_bounds = array<i64: 104, 128>}]} {
    %c0 = arith.constant 0 : index
    %c0_0 = arith.constant 0 : index
    %0 = vector.load %arg1[%c0, %c0_0] : memref<104x128xbf16, #tpu.memory_space<vmem>>, vector<104x128xbf16>
    %c0_1 = arith.constant 0 : index
    %c0_2 = arith.constant 0 : index
    %1 = vector.load %arg3[%c0_1, %c0_2] : memref<128x128xbf16, #tpu.memory_space<vmem>>, vector<128x128xbf16>
    %cst = arith.constant dense<0.000000e+00> : vector<104x128xf32>
    %2 = tpu.matmul %0, %1, %cst {dimension_numbers = #tpu.dot_dimension_numbers<[1], [0], [0], [1], [0, 0, 1, 1], [], []>} : vector<104x128xbf16>, vector<128x128xbf16>, vector<104x128xf32> -> vector<104x128xf32>
    %c0_3 = arith.constant 0 : index
    %c0_4 = arith.constant 0 : index
    %3 = vector.load %arg4[%c0_3, %c0_4] : memref<1x128xf32, #tpu.memory_space<vmem>>, vector<1x128xf32>
    %4 = vector.broadcast %3 : vector<1x128xf32> to vector<104x128xf32>
    %5 = arith.addf %2, %4 : vector<104x128xf32>
    %cst_5 = arith.constant 0.000000e+00 : f32
    %6 = vector.broadcast %cst_5 : f32 to vector<104x128xf32>
    %7 = arith.maximumf %5, %6 : vector<104x128xf32>
    %8 = arith.truncf %7 : vector<104x128xf32> to vector<104x128xbf16>
    %c0_6 = arith.constant 0 : index
    %c0_7 = arith.constant 0 : index
    %9 = vector.load %arg5[%c0_6, %c0_7] : memref<128x128xbf16, #tpu.memory_space<vmem>>, vector<128x128xbf16>
    %cst_8 = arith.constant dense<0.000000e+00> : vector<104x128xf32>
    %10 = tpu.matmul %8, %9, %cst_8 {dimension_numbers = #tpu.dot_dimension_numbers<[1], [0], [0], [1], [0, 0, 1, 1], [], []>} : vector<104x128xbf16>, vector<128x128xbf16>, vector<104x128xf32> -> vector<104x128xf32>
    %c0_9 = arith.constant 0 : index
    %c0_10 = arith.constant 0 : index
    %11 = vector.load %arg6[%c0_9, %c0_10] : memref<1x128xf32, #tpu.memory_space<vmem>>, vector<1x128xf32>
    %12 = vector.broadcast %11 : vector<1x128xf32> to vector<104x128xf32>
    %13 = arith.addf %10, %12 : vector<104x128xf32>
    %14 = arith.truncf %13 : vector<104x128xf32> to vector<104x128xbf16>
    %c0_11 = arith.constant 0 : index
    %c0_12 = arith.constant 0 : index
    %15 = vector.load %arg2[%c0_11, %c0_12] : memref<104x128xbf16, #tpu.memory_space<vmem>>, vector<104x128xbf16>
    %16 = arith.mulf %14, %15 : vector<104x128xbf16>
    %c0_13 = arith.constant 0 : index
    %c0_14 = arith.constant 0 : index
    %17 = vector.load %arg7[%c0_13, %c0_14] : memref<128x128xbf16, #tpu.memory_space<vmem>>, vector<128x128xbf16>
    %cst_15 = arith.constant dense<0.000000e+00> : vector<104x128xf32>
    %18 = tpu.matmul %16, %17, %cst_15 {dimension_numbers = #tpu.dot_dimension_numbers<[1], [0], [0], [1], [0, 0, 1, 1], [], []>} : vector<104x128xbf16>, vector<128x128xbf16>, vector<104x128xf32> -> vector<104x128xf32>
    %cst_16 = arith.constant dense<0.000000e+00> : vector<104xf32>
    %19 = vector.multi_reduction <add>, %18, %cst_16 [1] : vector<104x128xf32> to vector<104xf32>
    %20 = vector.shape_cast %19 : vector<104xf32> to vector<104x1xf32>
    %cst_17 = arith.constant 0.020833334 : f32
    %21 = vector.broadcast %cst_17 : f32 to vector<104x1xf32>
    %22 = arith.mulf %20, %21 : vector<104x1xf32>
    %23 = vector.broadcast %22 : vector<104x1xf32> to vector<104x128xf32>
    %24 = arith.subf %18, %23 : vector<104x128xf32>
    %c0_18 = arith.constant 0 : index
    %c0_19 = arith.constant 0 : index
    %25 = vector.load %arg10[%c0_18, %c0_19] : memref<1x128xf32, #tpu.memory_space<vmem>>, vector<1x128xf32>
    %26 = vector.broadcast %25 : vector<1x128xf32> to vector<104x128xf32>
    %27 = arith.mulf %24, %26 : vector<104x128xf32>
    %28 = arith.mulf %27, %27 : vector<104x128xf32>
    %cst_20 = arith.constant dense<0.000000e+00> : vector<104xf32>
    %29 = vector.multi_reduction <add>, %28, %cst_20 [1] : vector<104x128xf32> to vector<104xf32>
    %30 = vector.shape_cast %29 : vector<104xf32> to vector<104x1xf32>
    %cst_21 = arith.constant 0.020833334 : f32
    %31 = vector.broadcast %cst_21 : f32 to vector<104x1xf32>
    %32 = arith.mulf %30, %31 : vector<104x1xf32>
    %cst_22 = arith.constant 9.99999974E-6 : f32
    %33 = vector.broadcast %cst_22 : f32 to vector<104x1xf32>
    %34 = arith.addf %32, %33 : vector<104x1xf32>
    %35 = math.rsqrt %34 : vector<104x1xf32>
    %36 = vector.broadcast %35 : vector<104x1xf32> to vector<104x128xf32>
    %37 = arith.mulf %27, %36 : vector<104x128xf32>
    %c0_23 = arith.constant 0 : index
    %c0_24 = arith.constant 0 : index
    %38 = vector.load %arg8[%c0_23, %c0_24] : memref<1x128xf32, #tpu.memory_space<vmem>>, vector<1x128xf32>
    %39 = vector.broadcast %38 : vector<1x128xf32> to vector<104x128xf32>
    %40 = arith.mulf %37, %39 : vector<104x128xf32>
    %c0_25 = arith.constant 0 : index
    %c0_26 = arith.constant 0 : index
    %41 = vector.load %arg9[%c0_25, %c0_26] : memref<1x128xf32, #tpu.memory_space<vmem>>, vector<1x128xf32>
    %42 = vector.broadcast %41 : vector<1x128xf32> to vector<104x128xf32>
    %43 = arith.addf %40, %42 : vector<104x128xf32>
    %cst_27 = arith.constant 0.000000e+00 : f32
    %44 = vector.broadcast %cst_27 : f32 to vector<104x128xf32>
    %45 = arith.maximumf %43, %44 : vector<104x128xf32>
    %46 = arith.truncf %45 : vector<104x128xf32> to vector<104x128xbf16>
    %c0_28 = arith.constant 0 : index
    %c0_29 = arith.constant 0 : index
    %47 = vector.load %arg11[%c0_28, %c0_29] : memref<104x128xbf16, #tpu.memory_space<vmem>>, vector<104x128xbf16>
    tpu.vector_store %arg11[%c0_28, %c0_29], %46 {strides = array<i32>} : memref<104x128xbf16, #tpu.memory_space<vmem>>, vector<104x128xbf16>,
    return
  }
  func.func @transform_0(%arg0: i32) -> (i32, i32) {
    %c0_i32 = arith.constant 0 : i32
    %c0_i32_0 = arith.constant 0 : i32
    return %arg0, %c0_i32 : i32, i32
  }
  func.func @transform_1(%arg0: i32) -> (i32, i32) {
    %c0_i32 = arith.constant 0 : i32
    %c0_i32_0 = arith.constant 0 : i32
    return %arg0, %c0_i32 : i32, i32
  }
  func.func @transform_2(%arg0: i32) -> (i32, i32) {
    %c0_i32 = arith.constant 0 : i32
    %c0_i32_0 = arith.constant 0 : i32
    %c0_i32_1 = arith.constant 0 : i32
    return %c0_i32, %c0_i32_0 : i32, i32
  }
  func.func @transform_3(%arg0: i32) -> (i32, i32) {
    %c0_i32 = arith.constant 0 : i32
    %c0_i32_0 = arith.constant 0 : i32
    %c0_i32_1 = arith.constant 0 : i32
    return %c0_i32, %c0_i32_0 : i32, i32
  }
  func.func @transform_4(%arg0: i32) -> (i32, i32) {
    %c0_i32 = arith.constant 0 : i32
    %c0_i32_0 = arith.constant 0 : i32
    %c0_i32_1 = arith.constant 0 : i32
    return %c0_i32, %c0_i32_0 : i32, i32
  }
  func.func @transform_5(%arg0: i32) -> (i32, i32) {
    %c0_i32 = arith.constant 0 : i32
    %c0_i32_0 = arith.constant 0 : i32
    %c0_i32_1 = arith.constant 0 : i32
    return %c0_i32, %c0_i32_0 : i32, i32
  }
  func.func @transform_6(%arg0: i32) -> (i32, i32) {
    %c0_i32 = arith.constant 0 : i32
    %c0_i32_0 = arith.constant 0 : i32
    %c0_i32_1 = arith.constant 0 : i32
    return %c0_i32, %c0_i32_0 : i32, i32
  }
  func.func @transform_7(%arg0: i32) -> (i32, i32) {
    %c0_i32 = arith.constant 0 : i32
    %c0_i32_0 = arith.constant 0 : i32
    %c0_i32_1 = arith.constant 0 : i32
    return %c0_i32, %c0_i32_0 : i32, i32
  }
  func.func @transform_8(%arg0: i32) -> (i32, i32) {
    %c0_i32 = arith.constant 0 : i32
    %c0_i32_0 = arith.constant 0 : i32
    %c0_i32_1 = arith.constant 0 : i32
    return %c0_i32, %c0_i32_0 : i32, i32
  }
  func.func @transform_9(%arg0: i32) -> (i32, i32) {
    %c0_i32 = arith.constant 0 : i32
    %c0_i32_0 = arith.constant 0 : i32
    %c0_i32_1 = arith.constant 0 : i32
    return %c0_i32, %c0_i32_0 : i32, i32
  }
  func.func @transform_10(%arg0: i32) -> (i32, i32) {
    %c0_i32 = arith.constant 0 : i32
    %c0_i32_0 = arith.constant 0 : i32
    return %arg0, %c0_i32 : i32, i32
  }
}

</mosaic_0001>

<llo_original>
// kernel: tpu_custom_call.1
$region0: #{tpu_custom_call.1}
  #allocation0 [shape = 'u32[]', space=smem, size = 0x4, offset = 0x4, fixed_abs, tag = 'smem constant byte address 0x4 - core index']
  #allocation1 [shape = 'u32[144,128]{1,0:T(1,128)}', space=vmem, size = 0x12000, scoped, tag = 'internal scratch']
  %s0 = inlined_call_operand.hbm [shape: bf16[208,128], index: 0, kind: input, shape index: {}]
  %s1 = inlined_call_operand.hbm [shape: bf16[208,128], index: 1, kind: input, shape index: {}]
  %s2 = inlined_call_operand.hbm [shape: bf16[128,128], index: 2, kind: input, shape index: {}]
  %s3 = inlined_call_operand.vmem [shape: f32[1,128], index: 3, kind: input, shape index: {}]
  %s4 = inlined_call_operand.hbm [shape: bf16[128,128], index: 4, kind: input, shape index: {}]
  %s5 = inlined_call_operand.vmem [shape: f32[1,128], index: 5, kind: input, shape index: {}]
  %s6 = inlined_call_operand.hbm [shape: bf16[128,128], index: 6, kind: input, shape index: {}]
  %s7 = inlined_call_operand.vmem [shape: f32[1,128], index: 7, kind: input, shape index: {}]
  %s8 = inlined_call_operand.vmem [shape: f32[1,128], index: 8, kind: input, shape index: {}]
  %s9 = inlined_call_operand.vmem [shape: f32[1,128], index: 9, kind: input, shape index: {}]
  %s10 = inlined_call_operand.hbm [shape: bf16[208,128], index: 10, kind: output, shape index: {}]
  %s11 = sld [smem:[#allocation0]]
  $region93: #{tpu_custom_call.1} parent=0
    _
  %s13 = ssub.s32 1, %s11
  %s14 = scalar_select 0, %s13, %s11
  $region1: #{tpu_custom_call.1} parent=0
    #allocation2 [shape = 'u8[53248]{0}', space=vmem, size = 0xd000, scoped, tag = 'input window, operand 0']
    #allocation3 [shape = 's32[2]{0}', space=sflag, size = 0x8, scoped, tag = 'scoped memory for tpu_custom_call.1']
    #allocation4 [shape = 's32[2]{0}', space=sflag, size = 0x8, scoped, tag = 'scoped memory for tpu_custom_call.1']
    #allocation5 [shape = 'u8[53248]{0}', space=vmem, size = 0xd000, scoped, tag = 'input window, operand 1']
    #allocation6 [shape = 's32[2]{0}', space=sflag, size = 0x8, scoped, tag = 'scoped memory for tpu_custom_call.1']
    #allocation7 [shape = 'u8[32768]{0}', space=vmem, size = 0x8000, scoped, tag = 'input window, operand 2, single buffered']
    #allocation8 [shape = 'u8[32768]{0}', space=vmem, size = 0x8000, scoped, tag = 'input window, operand 4, single buffered']
    #allocation9 [shape = 's32[1]{0}', space=sflag, size = 0x4, scoped, tag = 'scoped memory for tpu_custom_call.1']
    #allocation10 [shape = 'u8[32768]{0}', space=vmem, size = 0x8000, scoped, tag = 'input window, operand 6, single buffered']
    #allocation11 [shape = 'u8[53248]{0}', space=vmem, size = 0xd000, scoped, tag = 'output window, operand 0']
    %15 = vsyncpa [#allocation3], 0
    %s16 = scalar_lea.sflag [#allocation3], 1
    %17 = vsyncpa %s16, 0
    %18 = vsyncpa [#allocation6], 0
    %s19 = scalar_lea.sflag [#allocation6], 1
    %20 = vsyncpa %s19, 0
    %21 = vsyncpa [#allocation9], 0
    %22 = vsyncpa [#allocation4], 0
    %s23 = scalar_lea.sflag [#allocation4], 1
    %24 = vsyncpa %s23, 0
    loop: start=0, step=1, limit=4
    $region2: #{tpu_custom_call.1} parent=1 // loop_pre_header
      _
    $region3: #{tpu_custom_call.1} parent=1 // loop_header
      %s26 = sphi 0, %s30
      %p27 = scmp.ge.s32.totalorder %s26, 4
      %s36 = sphi 0, %s38
      %s39 = sphi 0, %s36
      %s40 = sphi 0, %s39
      %s56 = sphi 0, %s40
      %s62 = sphi 0, %s64
      %s65 = sphi 0, %s62
      %s66 = sphi 0, %s65
      %s82 = sphi 0, %s66
      %s86 = sphi 0, %s86
      %s88 = sphi 0, %s86
      %s89 = sphi 0, %s88
      %s103 = sphi 0, %s89
      %s107 = sphi 0, %s107
      %s109 = sphi 0, %s107
      %s110 = sphi 0, %s109
      %s124 = sphi 0, %s110
      %s128 = sphi 0, %s128
      %s130 = sphi 0, %s128
      %s131 = sphi 0, %s130
      %s145 = sphi 0, %s131
      %s149 = sphi 0, %s149
      %s151 = sphi 0, %s149
      %s152 = sphi 0, %s151
      %s166 = sphi 0, %s152
      %s170 = sphi 0, %s170
      %s172 = sphi 0, %s170
      %s173 = sphi 0, %s172
      %s187 = sphi 0, %s173
      %s191 = sphi 0, %s191
      %s193 = sphi 0, %s191
      %s194 = sphi 0, %s193
      %s208 = sphi 0, %s194
      %s212 = sphi 0, %s212
      %s214 = sphi 0, %s212
      %s215 = sphi 0, %s214
      %s229 = sphi 0, %s215
      %s233 = sphi 0, %s233
      %s235 = sphi 0, %s233
      %s236 = sphi 0, %s235
      %s250 = sphi 0, %s236
      %s256 = sphi 0, %s258
      %s259 = sphi 0, %s256
      %s260 = sphi 0, %s259
      %s276 = sphi 0, %s260
    $region4: #{tpu_custom_call.1} parent=1 // loop_header_branch
      %29 = sbr.rel (%p27) target = $region8
    $region5: #{tpu_custom_call.1} parent=1 // loop_body
      %s31 = ssub.s32 %s26, 1
      %s32 = ssub.s32 %s26, 2
      %s33 = sadd.s32 %s26, 1
      %s34 = ssub.s32 %s26, %s33
      %p35 = scmp.eq.s32.totalorder %s34, 0
      %s37 = sadd.s32 %s36, 1
      %s38 = scalar_select %p35, %s36, %s37
      %p41 = pneg %p35
      %p42 = scmp.eq.s32.totalorder %s26, 1
      %p43 = por %p41, %p42
      %p44 = scmp.ne.s32.totalorder %s36, %s39
      %p45 = scmp.eq.s32.totalorder %s26, 0
      %p46 = por %p44, %p45
      %p47 = scmp.ne.s32.totalorder %s36, %s39
      %p48 = scmp.eq.s32.totalorder %s31, 1
      %p49 = por %p47, %p48
      %p50 = scmp.ne.s32.totalorder %s39, %s40
      %p51 = scmp.eq.s32.totalorder %s31, 0
      %p52 = por %p50, %p51
      %p53 = scmp.ne.s32.totalorder %s39, %s40
      %p54 = scmp.eq.s32.totalorder %s32, 1
      %p55 = por %p53, %p54
      %p57 = scmp.ne.s32.totalorder %s40, %s56
      %p58 = scmp.eq.s32.totalorder %s32, 0
      %p59 = por %p57, %p58
      %s60 = ssub.s32 %s26, %s33
      %p61 = scmp.eq.s32.totalorder %s60, 0
      %s63 = sadd.s32 %s62, 1
      %s64 = scalar_select %p61, %s62, %s63
      %p67 = pneg %p61
      %p68 = scmp.eq.s32.totalorder %s26, 1
      %p69 = por %p67, %p68
      %p70 = scmp.ne.s32.totalorder %s62, %s65
      %p71 = scmp.eq.s32.totalorder %s26, 0
      %p72 = por %p70, %p71
      %p73 = scmp.ne.s32.totalorder %s62, %s65
      %p74 = scmp.eq.s32.totalorder %s31, 1
      %p75 = por %p73, %p74
      %p76 = scmp.ne.s32.totalorder %s65, %s66
      %p77 = scmp.eq.s32.totalorder %s31, 0
      %p78 = por %p76, %p77
      %p79 = scmp.ne.s32.totalorder %s65, %s66
      %p80 = scmp.eq.s32.totalorder %s32, 1
      %p81 = por %p79, %p80
      %p83 = scmp.ne.s32.totalorder %s66, %s82
      %p84 = scmp.eq.s32.totalorder %s32, 0
      %p85 = por %p83, %p84
      %s87 = sadd.s32 %s86, 1
      %p90 = scmp.eq.s32.totalorder %s26, 1
      %p91 = scmp.ne.s32.totalorder %s86, %s88
      %p92 = scmp.eq.s32.totalorder %s26, 0
      %p93 = por %p91, %p92
      %p94 = scmp.ne.s32.totalorder %s86, %s88
      %p95 = scmp.eq.s32.totalorder %s31, 1
      %p96 = por %p94, %p95
      %p97 = scmp.ne.s32.totalorder %s88, %s89
      %p98 = scmp.eq.s32.totalorder %s31, 0
      %p99 = por %p97, %p98
      %p100 = scmp.ne.s32.totalorder %s88, %s89
      %p101 = scmp.eq.s32.totalorder %s32, 1
      %p102 = por %p100, %p101
      %p104 = scmp.ne.s32.totalorder %s89, %s103
      %p105 = scmp.eq.s32.totalorder %s32, 0
      %p106 = por %p104, %p105
      %s108 = sadd.s32 %s107, 1
      %p111 = scmp.eq.s32.totalorder %s26, 1
      %p112 = scmp.ne.s32.totalorder %s107, %s109
      %p113 = scmp.eq.s32.totalorder %s26, 0
      %p114 = por %p112, %p113
      %p115 = scmp.ne.s32.totalorder %s107, %s109
      %p116 = scmp.eq.s32.totalorder %s31, 1
      %p117 = por %p115, %p116
      %p118 = scmp.ne.s32.totalorder %s109, %s110
      %p119 = scmp.eq.s32.totalorder %s31, 0
      %p120 = por %p118, %p119
      %p121 = scmp.ne.s32.totalorder %s109, %s110
      %p122 = scmp.eq.s32.totalorder %s32, 1
      %p123 = por %p121, %p122
      %p125 = scmp.ne.s32.totalorder %s110, %s124
      %p126 = scmp.eq.s32.totalorder %s32, 0
      %p127 = por %p125, %p126
      %s129 = sadd.s32 %s128, 1
      %p132 = scmp.eq.s32.totalorder %s26, 1
      %p133 = scmp.ne.s32.totalorder %s128, %s130
      %p134 = scmp.eq.s32.totalorder %s26, 0
      %p135 = por %p133, %p134
      %p136 = scmp.ne.s32.totalorder %s128, %s130
      %p137 = scmp.eq.s32.totalorder %s31, 1
      %p138 = por %p136, %p137
      %p139 = scmp.ne.s32.totalorder %s130, %s131
      %p140 = scmp.eq.s32.totalorder %s31, 0
      %p141 = por %p139, %p140
      %p142 = scmp.ne.s32.totalorder %s130, %s131
      %p143 = scmp.eq.s32.totalorder %s32, 1
      %p144 = por %p142, %p143
      %p146 = scmp.ne.s32.totalorder %s131, %s145
      %p147 = scmp.eq.s32.totalorder %s32, 0
      %p148 = por %p146, %p147
      %s150 = sadd.s32 %s149, 1
      %p153 = scmp.eq.s32.totalorder %s26, 1
      %p154 = scmp.ne.s32.totalorder %s149, %s151
      %p155 = scmp.eq.s32.totalorder %s26, 0
      %p156 = por %p154, %p155
      %p157 = scmp.ne.s32.totalorder %s149, %s151
      %p158 = scmp.eq.s32.totalorder %s31, 1
      %p159 = por %p157, %p158
      %p160 = scmp.ne.s32.totalorder %s151, %s152
      %p161 = scmp.eq.s32.totalorder %s31, 0
      %p162 = por %p160, %p161
      %p163 = scmp.ne.s32.totalorder %s151, %s152
      %p164 = scmp.eq.s32.totalorder %s32, 1
      %p165 = por %p163, %p164
      %p167 = scmp.ne.s32.totalorder %s152, %s166
      %p168 = scmp.eq.s32.totalorder %s32, 0
      %p169 = por %p167, %p168
      %s171 = sadd.s32 %s170, 1
      %p174 = scmp.eq.s32.totalorder %s26, 1
      %p175 = scmp.ne.s32.totalorder %s170, %s172
      %p176 = scmp.eq.s32.totalorder %s26, 0
      %p177 = por %p175, %p176
      %p178 = scmp.ne.s32.totalorder %s170, %s172
      %p179 = scmp.eq.s32.totalorder %s31, 1
      %p180 = por %p178, %p179
      %p181 = scmp.ne.s32.totalorder %s172, %s173
      %p182 = scmp.eq.s32.totalorder %s31, 0
      %p183 = por %p181, %p182
      %p184 = scmp.ne.s32.totalorder %s172, %s173
      %p185 = scmp.eq.s32.totalorder %s32, 1
      %p186 = por %p184, %p185
      %p188 = scmp.ne.s32.totalorder %s173, %s187
      %p189 = scmp.eq.s32.totalorder %s32, 0
      %p190 = por %p188, %p189
      %s192 = sadd.s32 %s191, 1
      %p195 = scmp.eq.s32.totalorder %s26, 1
      %p196 = scmp.ne.s32.totalorder %s191, %s193
      %p197 = scmp.eq.s32.totalorder %s26, 0
      %p198 = por %p196, %p197
      %p199 = scmp.ne.s32.totalorder %s191, %s193
      %p200 = scmp.eq.s32.totalorder %s31, 1
      %p201 = por %p199, %p200
      %p202 = scmp.ne.s32.totalorder %s193, %s194
      %p203 = scmp.eq.s32.totalorder %s31, 0
      %p204 = por %p202, %p203
      %p205 = scmp.ne.s32.totalorder %s193, %s194
      %p206 = scmp.eq.s32.totalorder %s32, 1
      %p207 = por %p205, %p206
      %p209 = scmp.ne.s32.totalorder %s194, %s208
      %p210 = scmp.eq.s32.totalorder %s32, 0
      %p211 = por %p209, %p210
      %s213 = sadd.s32 %s212, 1
      %p216 = scmp.eq.s32.totalorder %s26, 1
      %p217 = scmp.ne.s32.totalorder %s212, %s214
      %p218 = scmp.eq.s32.totalorder %s26, 0
      %p219 = por %p217, %p218
      %p220 = scmp.ne.s32.totalorder %s212, %s214
      %p221 = scmp.eq.s32.totalorder %s31, 1
      %p222 = por %p220, %p221
      %p223 = scmp.ne.s32.totalorder %s214, %s215
      %p224 = scmp.eq.s32.totalorder %s31, 0
      %p225 = por %p223, %p224
      %p226 = scmp.ne.s32.totalorder %s214, %s215
      %p227 = scmp.eq.s32.totalorder %s32, 1
      %p228 = por %p226, %p227
      %p230 = scmp.ne.s32.totalorder %s215, %s229
      %p231 = scmp.eq.s32.totalorder %s32, 0
      %p232 = por %p230, %p231
      %s234 = sadd.s32 %s233, 1
      %p237 = scmp.eq.s32.totalorder %s26, 1
      %p238 = scmp.ne.s32.totalorder %s233, %s235
      %p239 = scmp.eq.s32.totalorder %s26, 0
      %p240 = por %p238, %p239
      %p241 = scmp.ne.s32.totalorder %s233, %s235
      %p242 = scmp.eq.s32.totalorder %s31, 1
      %p243 = por %p241, %p242
      %p244 = scmp.ne.s32.totalorder %s235, %s236
      %p245 = scmp.eq.s32.totalorder %s31, 0
      %p246 = por %p244, %p245
      %p247 = scmp.ne.s32.totalorder %s235, %s236
      %p248 = scmp.eq.s32.totalorder %s32, 1
      %p249 = por %p247, %p248
      %p251 = scmp.ne.s32.totalorder %s236, %s250
      %p252 = scmp.eq.s32.totalorder %s32, 0
      %p253 = por %p251, %p252
      %s254 = ssub.s32 %s26, %s33
      %p255 = scmp.eq.s32.totalorder %s254, 0
      %s257 = sadd.s32 %s256, 1
      %s258 = scalar_select %p255, %s256, %s257
      %p261 = pneg %p255
      %p262 = scmp.eq.s32.totalorder %s26, 1
      %p263 = por %p261, %p262
      %p264 = scmp.ne.s32.totalorder %s256, %s259
      %p265 = scmp.eq.s32.totalorder %s26, 0
      %p266 = por %p264, %p265
      %p267 = scmp.ne.s32.totalorder %s256, %s259
      %p268 = scmp.eq.s32.totalorder %s31, 1
      %p269 = por %p267, %p268
      %p270 = scmp.ne.s32.totalorder %s259, %s260
      %p271 = scmp.eq.s32.totalorder %s31, 0
      %p272 = por %p270, %p271
      %p273 = scmp.ne.s32.totalorder %s259, %s260
      %p274 = scmp.eq.s32.totalorder %s32, 1
      %p275 = por %p273, %p274
      %p277 = scmp.ne.s32.totalorder %s260, %s276
      %p278 = scmp.eq.s32.totalorder %s32, 0
      %p279 = por %p277, %p278
      %p280 = scmp.le.s32.totalorder 1, %s26
      %p281 = scmp.lt.s32.totalorder %s26, 3
      %p282 = pnand %p280, %p281
      %p283 = pneg %p282
      // Predicated region
      $region9: #{tpu_custom_call.1} parent=5 // pred_check
        _
      $region10: #{tpu_custom_call.1} parent=5 // pred_check_branch
        %285 = sbr.rel (%p282) target = $region12
      $region11: #{tpu_custom_call.1} parent=5 // pred_region
        %s286 = ssub.s32 %s26, 1
        // Predicated region
        $region13: #{tpu_custom_call.1} parent=11 // pred_check
          %p287 = pneg %p99
        $region14: #{tpu_custom_call.1} parent=11 // pred_check_branch
          %289 = sbr.rel (%p287) target = $region16
        $region15: #{tpu_custom_call.1} parent=11 // pred_region
          %s291 = ssub.s32 1024, 1024
          %292 = vsyncadd [#allocation6], %s291
          %s293 = sshll.u32 [#allocation7], 4
          %s294 = int_to_ptr.vmem [resolvable:$true] %s293
          %299 = dma.hbm_to_vmem [thread:$0]  %s2, 1024, %s294, [#allocation6], 64, 64, 4
        $region16: #{tpu_custom_call.1} parent=11 // pred_fallthru
          _
        // Predicated region
        $region17: #{tpu_custom_call.1} parent=11 // pred_check
          %p300 = pneg %p120
        $region18: #{tpu_custom_call.1} parent=11 // pred_check_branch
          %302 = sbr.rel (%p300) target = $region20
        $region19: #{tpu_custom_call.1} parent=11 // pred_region
          _
        $region20: #{tpu_custom_call.1} parent=11 // pred_fallthru
          _
        // Predicated region
        $region21: #{tpu_custom_call.1} parent=11 // pred_check
          %p303 = pneg %p141
        $region22: #{tpu_custom_call.1} parent=11 // pred_check_branch
          %305 = sbr.rel (%p303) target = $region24
        $region23: #{tpu_custom_call.1} parent=11 // pred_region
          %s307 = ssub.s32 1024, 1024
          %308 = vsyncadd [#allocation9], %s307
          %s309 = sshll.u32 [#allocation8], 4
          %s310 = int_to_ptr.vmem [resolvable:$true] %s309
          %315 = dma.hbm_to_vmem [thread:$0]  %s4, 1024, %s310, [#allocation9], 64, 64, 4
        $region24: #{tpu_custom_call.1} parent=11 // pred_fallthru
          _
        // Predicated region
        $region25: #{tpu_custom_call.1} parent=11 // pred_check
          %p316 = pneg %p162
        $region26: #{tpu_custom_call.1} parent=11 // pred_check_branch
          %318 = sbr.rel (%p316) target = $region28
        $region27: #{tpu_custom_call.1} parent=11 // pred_region
          _
        $region28: #{tpu_custom_call.1} parent=11 // pred_fallthru
          _
        // Predicated region
        $region29: #{tpu_custom_call.1} parent=11 // pred_check
          %p319 = pneg %p183
        $region30: #{tpu_custom_call.1} parent=11 // pred_check_branch
          %321 = sbr.rel (%p319) target = $region32
        $region31: #{tpu_custom_call.1} parent=11 // pred_region
          %s323 = ssub.s32 1024, 1024
          %324 = vsyncadd [#allocation9], %s323
          %s325 = sshll.u32 [#allocation10], 4
          %s326 = int_to_ptr.vmem [resolvable:$true] %s325
          %331 = dma.hbm_to_vmem [thread:$0]  %s6, 1024, %s326, [#allocation9], 64, 64, 4
        $region32: #{tpu_custom_call.1} parent=11 // pred_fallthru
          _
        // Predicated region
        $region33: #{tpu_custom_call.1} parent=11 // pred_check
          %p332 = pneg %p204
        $region34: #{tpu_custom_call.1} parent=11 // pred_check_branch
          %334 = sbr.rel (%p332) target = $region36
        $region35: #{tpu_custom_call.1} parent=11 // pred_region
          _
        $region36: #{tpu_custom_call.1} parent=11 // pred_fallthru
          _
        // Predicated region
        $region37: #{tpu_custom_call.1} parent=11 // pred_check
          %p335 = pneg %p225
        $region38: #{tpu_custom_call.1} parent=11 // pred_check_branch
          %337 = sbr.rel (%p335) target = $region40
        $region39: #{tpu_custom_call.1} parent=11 // pred_region
          _
        $region40: #{tpu_custom_call.1} parent=11 // pred_fallthru
          _
        // Predicated region
        $region41: #{tpu_custom_call.1} parent=11 // pred_check
          %p338 = pneg %p246
        $region42: #{tpu_custom_call.1} parent=11 // pred_check_branch
          %340 = sbr.rel (%p338) target = $region44
        $region43: #{tpu_custom_call.1} parent=11 // pred_region
          _
        $region44: #{tpu_custom_call.1} parent=11 // pred_fallthru
          _
      $region12: #{tpu_custom_call.1} parent=5 // pred_fallthru
        _
      %p341 = scmp.lt.s32.totalorder %s26, 2
      // Predicated region
      $region45: #{tpu_custom_call.1} parent=5 // pred_check
        %p342 = pneg %p341
      $region46: #{tpu_custom_call.1} parent=5 // pred_check_branch
        %344 = sbr.rel (%p342) target = $region48
      $region47: #{tpu_custom_call.1} parent=5 // pred_region
        // Predicated region
        $region49: #{tpu_custom_call.1} parent=47 // pred_check
          %p345 = pneg %p46
        $region50: #{tpu_custom_call.1} parent=47 // pred_check_branch
          %347 = sbr.rel (%p345) target = $region52
        $region51: #{tpu_custom_call.1} parent=47 // pred_region
          %s348 = sand.u32 %s36, 1
          %s349 = scalar_lea.sflag [#allocation3], %s348
          %s350 = sand.u32 %s36, 1
          %s351 = smul.addr %s350, 52
          %s352 = scalar_lea.vmem [#allocation2], %s351
          %s353 = smul.u32 13, %s26
          %s355 = ssub.s32 832, 832
          %356 = vsyncadd %s349, %s355
          %s357 = smul.addr %s353, 64
          %s358 = scalar_lea.hbm %s0, %s357
          %s359 = sshll.u32 %s352, 4
          %s360 = int_to_ptr.vmem [resolvable:$true] %s359
          %365 = dma.hbm_to_vmem [thread:$0]  %s358, 832, %s360, %s349, 64, 64, 4
        $region52: #{tpu_custom_call.1} parent=47 // pred_fallthru
          _
        // Predicated region
        $region53: #{tpu_custom_call.1} parent=47 // pred_check
          %p366 = pneg %p72
        $region54: #{tpu_custom_call.1} parent=47 // pred_check_branch
          %368 = sbr.rel (%p366) target = $region56
        $region55: #{tpu_custom_call.1} parent=47 // pred_region
          %s369 = sand.u32 %s26, 1
          %s370 = scalar_lea.sflag [#allocation6], %s369
          %s371 = sand.u32 %s62, 1
          %s372 = smul.addr %s371, 52
          %s373 = scalar_lea.vmem [#allocation5], %s372
          %s374 = smul.u32 13, %s26
          %s376 = ssub.s32 832, 832
          %377 = vsyncadd %s370, %s376
          %s378 = smul.addr %s374, 64
          %s379 = scalar_lea.hbm %s1, %s378
          %s380 = sshll.u32 %s373, 4
          %s381 = int_to_ptr.vmem [resolvable:$true] %s380
          %386 = dma.hbm_to_vmem [thread:$0]  %s379, 832, %s381, %s370, 64, 64, 4
        $region56: #{tpu_custom_call.1} parent=47 // pred_fallthru
          _
      $region48: #{tpu_custom_call.1} parent=5 // pred_fallthru
        _
      %p387 = scmp.le.s32.totalorder 1, %s26
      %p388 = scmp.lt.s32.totalorder %s26, 3
      %p389 = pnand %p387, %p388
      %p390 = pneg %p389
      // Predicated region
      $region57: #{tpu_custom_call.1} parent=5 // pred_check
        _
      $region58: #{tpu_custom_call.1} parent=5 // pred_check_branch
        %392 = sbr.rel (%p389) target = $region60
      $region59: #{tpu_custom_call.1} parent=5 // pred_region
        %s393 = ssub.s32 %s26, 1
        %s394 = sand.u32 %s39, 1
        %s395 = scalar_lea.sflag [#allocation3], %s394
        %s396 = sand.u32 %s39, 1
        %s397 = smul.addr %s396, 52
        %s398 = scalar_lea.vmem [#allocation2], %s397
        // Predicated region
        $region61: #{tpu_custom_call.1} parent=59 // pred_check
          %p399 = pneg %p52
        $region62: #{tpu_custom_call.1} parent=59 // pred_check_branch
          %401 = sbr.rel (%p399) target = $region64
        $region63: #{tpu_custom_call.1} parent=59 // pred_region
          %402 = dma.done %s395, 832
        $region64: #{tpu_custom_call.1} parent=59 // pred_fallthru
          _
        %s403 = sand.u32 %s31, 1
        %s404 = scalar_lea.sflag [#allocation6], %s403
        %s405 = sand.u32 %s65, 1
        %s406 = smul.addr %s405, 52
        %s407 = scalar_lea.vmem [#allocation5], %s406
        // Predicated region
        $region65: #{tpu_custom_call.1} parent=59 // pred_check
          %p408 = pneg %p78
        $region66: #{tpu_custom_call.1} parent=59 // pred_check_branch
          %410 = sbr.rel (%p408) target = $region68
        $region67: #{tpu_custom_call.1} parent=59 // pred_region
          %411 = dma.done %s404, 832
        $region68: #{tpu_custom_call.1} parent=59 // pred_fallthru
          _
        // Predicated region
        $region69: #{tpu_custom_call.1} parent=59 // pred_check
          %p412 = pneg %p99
        $region70: #{tpu_custom_call.1} parent=59 // pred_check_branch
          %414 = sbr.rel (%p412) target = $region72
        $region71: #{tpu_custom_call.1} parent=59 // pred_region
          %415 = dma.done [#allocation6], 1024
        $region72: #{tpu_custom_call.1} parent=59 // pred_fallthru
          _
        // Predicated region
        $region73: #{tpu_custom_call.1} parent=59 // pred_check
          %p416 = pneg %p141
        $region74: #{tpu_custom_call.1} parent=59 // pred_check_branch
          %418 = sbr.rel (%p416) target = $region76
        $region75: #{tpu_custom_call.1} parent=59 // pred_region
          %419 = dma.done [#allocation9], 1024
        $region76: #{tpu_custom_call.1} parent=59 // pred_fallthru
          _
        // Predicated region
        $region77: #{tpu_custom_call.1} parent=59 // pred_check
          %p420 = pneg %p183
        $region78: #{tpu_custom_call.1} parent=59 // pred_check_branch
          %422 = sbr.rel (%p420) target = $region80
        $region79: #{tpu_custom_call.1} parent=59 // pred_region
          %423 = dma.done [#allocation9], 1024
        $region80: #{tpu_custom_call.1} parent=59 // pred_fallthru
          _
        %s424 = sand.u32 %s39, 1
        %s425 = scalar_lea.sflag [#allocation3], %s424
        %s426 = sand.u32 %s39, 1
        %s427 = smul.addr %s426, 52
        %s428 = scalar_lea.vmem [#allocation2], %s427
        %p429 = pneg %p52
        %p430 = pneg %p49
        %s431 = sand.u32 %s31, 1
        %s432 = scalar_lea.sflag [#allocation6], %s431
        %s433 = sand.u32 %s65, 1
        %s434 = smul.addr %s433, 52
        %s435 = scalar_lea.vmem [#allocation5], %s434
        %p436 = pneg %p78
        %p437 = pneg %p75
        %p438 = pneg %p99
        %p439 = pneg %p96
        %p440 = pneg %p120
        %p441 = pneg %p117
        %p442 = pneg %p141
        %p443 = pneg %p138
        %p444 = pneg %p162
        %p445 = pneg %p159
        %p446 = pneg %p183
        %p447 = pneg %p180
        %p448 = pneg %p204
        %p449 = pneg %p201
        %p450 = pneg %p225
        %p451 = pneg %p222
        %p452 = pneg %p246
        %p453 = pneg %p243
        %p454 = pneg %p272
        %p455 = pneg %p269
        %s456 = sand.u32 %s259, 1
        %s457 = scalar_lea.sflag [#allocation4], %s456
        %s458 = sand.u32 %s259, 1
        %s459 = smul.addr %s458, 52
        %s460 = scalar_lea.vmem [#allocation11], %s459
        %s461 = smul.u32 13, %s31
        %s462 = smul.u32 13, %s31
        %s463 = smul.u32 13, %s31
        %v465 = vld [vmem:[%s398] sm:$0xf]
        %v466 = vld [vmem:[%s398 + $0x4] sm:$0xf]
        %v467 = vld [vmem:[%s398 + $0x8] sm:$0xf]
        %v468 = vld [vmem:[%s398 + $0xc] sm:$0xf]
        %v469 = vld [vmem:[%s398 + $0x10] sm:$0xf]
        %v470 = vld [vmem:[%s398 + $0x14] sm:$0xf]
        %v471 = vld [vmem:[%s398 + $0x18] sm:$0xf]
        %v472 = vld [vmem:[%s398 + $0x1c] sm:$0xf]
        %v473 = vld [vmem:[%s398 + $0x20] sm:$0xf]
        %v474 = vld [vmem:[%s398 + $0x24] sm:$0xf]
        %v475 = vld [vmem:[%s398 + $0x28] sm:$0xf]
        %v476 = vld [vmem:[%s398 + $0x2c] sm:$0xf]
        %v477 = vld [vmem:[%s398 + $0x30] sm:$0xf]
        %v478 = vld [vmem:[#allocation7] sm:$0xf]
        %v479 = vld [vmem:[#allocation7 + $0x4] sm:$0xf]
        %v480 = vld [vmem:[#allocation7 + $0x8] sm:$0xf]
        %v481 = vld [vmem:[#allocation7 + $0xc] sm:$0xf]
        %v482 = vld [vmem:[#allocation7 + $0x10] sm:$0xf]
        %v483 = vld [vmem:[#allocation7 + $0x14] sm:$0xf]
        %v484 = vld [vmem:[#allocation7 + $0x18] sm:$0xf]
        %v485 = vld [vmem:[#allocation7 + $0x1c] sm:$0xf]
        %v486 = vld [vmem:[#allocation7 + $0x20] sm:$0xf]
        %v487 = vld [vmem:[#allocation7 + $0x24] sm:$0xf]
        %v488 = vld [vmem:[#allocation7 + $0x28] sm:$0xf]
        %v489 = vld [vmem:[#allocation7 + $0x2c] sm:$0xf]
        %v490 = vld [vmem:[#allocation7 + $0x30] sm:$0xf]
        %v491 = vld [vmem:[#allocation7 + $0x34] sm:$0xf]
        %v492 = vld [vmem:[#allocation7 + $0x38] sm:$0xf]
        %v493 = vld [vmem:[#allocation7 + $0x3c] sm:$0xf]
        %v494 = vld [vmem:[%s3] sm:$0x1]
        %v496 = vlaneseq
        %v497 = vshrl.u32 %v496, 7
        %v498 = vsub.s32 0, %v497
        %v499 = vrot.slane %v494, %v498
        %v514 = vunpack.c.l.b16 %v465
        %v515 = vunpack.c.l.b16 %v466
        %v516 = vunpack.c.l.b16 %v467
        %v517 = vunpack.c.l.b16 %v468
        %v518 = vunpack.c.l.b16 %v469
        %v519 = vunpack.c.l.b16 %v470
        %v520 = vunpack.c.l.b16 %v471
        %v521 = vunpack.c.l.b16 %v472
        %v522 = vunpack.c.l.b16 %v473
        %v523 = vunpack.c.l.b16 %v474
        %v524 = vunpack.c.l.b16 %v475
        %v525 = vunpack.c.l.b16 %v476
        %v526 = vunpack.c.l.b16 %v477
        %v527 = vpack.c.b16 %v515, %v514
        %v528 = vpack.c.b16 %v517, %v516
        %v529 = vpack.c.b16 %v519, %v518
        %v530 = vpack.c.b16 %v521, %v520
        %v531 = vpack.c.b16 %v523, %v522
        %v532 = vpack.c.b16 %v525, %v524
        %v533 = vpack.c.b16 %v526, %v526
        %v557 = vunpack.c.l.b16 %v478
        %v558 = vunpack.c.l.b16 %v479
        %v559 = vunpack.c.l.b16 %v480
        %v560 = vunpack.c.l.b16 %v481
        %v561 = vunpack.c.l.b16 %v482
        %v562 = vunpack.c.l.b16 %v483
        %v563 = vunpack.c.l.b16 %v484
        %v564 = vunpack.c.l.b16 %v485
        %v565 = vunpack.c.l.b16 %v486
        %v566 = vunpack.c.l.b16 %v487
        %v567 = vunpack.c.l.b16 %v488
        %v568 = vunpack.c.l.b16 %v489
        %v569 = vunpack.c.l.b16 %v490
        %v570 = vunpack.c.l.b16 %v491
        %v571 = vunpack.c.l.b16 %v492
        %v572 = vunpack.c.l.b16 %v493
        %v573 = vpack.c.b16 %v558, %v557
        %v574 = vpack.c.b16 %v560, %v559
        %v575 = vpack.c.b16 %v562, %v561
        %v576 = vpack.c.b16 %v564, %v563
        %v577 = vpack.c.b16 %v566, %v565
        %v578 = vpack.c.b16 %v568, %v567
        %v579 = vpack.c.b16 %v570, %v569
        %v580 = vpack.c.b16 %v572, %v571
        %589 = vmatprep.subr.bf16.mxu0 0
        %590 = vmatpush1.bf16.msra.mxu0 %v580
        %591 = vmatprep.subr.bf16.mxu0 0
        %592 = vmatpush1.bf16.msra.mxu0 %v579
        %593 = vmatprep.subr.bf16.mxu0 0
        %594 = vmatpush1.bf16.msra.mxu0 %v578
        %595 = vmatprep.subr.bf16.mxu0 0
        %596 = vmatpush1.bf16.msra.mxu0 %v577
        %597 = vmatprep.subr.bf16.mxu0 0
        %598 = vmatpush1.bf16.msra.mxu0 %v576
        %599 = vmatprep.subr.bf16.mxu0 0
        %600 = vmatpush1.bf16.msra.mxu0 %v575
        %601 = vmatprep.subr.bf16.mxu0 0
        %602 = vmatpush1.bf16.msra.mxu0 %v574
        %603 = vmatprep.subr.bf16.mxu0 0
        %604 = vmatpush1.bf16.msra.mxu0 %v573
        %605 = vmatprep.subr.bf16.mxu0 0
        %606 = vmatpush2.bf16.msra.mxu0 0
        %607 = vmatprep.subr.bf16.mxu0 0
        %608 = vmatpush2.bf16.msra.mxu0 0
        %609 = vmatprep.subr.bf16.mxu0 0
        %610 = vmatpush2.bf16.msra.mxu0 0
        %611 = vmatprep.subr.bf16.mxu0 0
        %612 = vmatpush2.bf16.msra.mxu0 0
        %613 = vmatprep.subr.bf16.mxu0 0
        %614 = vmatpush2.bf16.msra.mxu0 0
        %615 = vmatprep.subr.bf16.mxu0 0
        %616 = vmatpush2.bf16.msra.mxu0 0
        %617 = vmatprep.subr.bf16.mxu0 0
        %618 = vmatpush2.bf16.msra.mxu0 0
        %619 = vmatprep.subr.bf16.mxu0 0
        %620 = vmatpush2.bf16.msra.mxu0 0
        %621 = vmatprep.mubr.bf16.mxu0 0
        %622 = vmatmul.mubr.bf16.gmra.mxu0 %v527
        %v623 = vpop.f32.mrf.mxu0
        %v624 = vadd.f32 %v499, %v623
        %v625 = vpop.f32.mrf.mxu0
        %v626 = vpop.f32.mrf.mxu0
        %v627 = vadd.f32 %v499, %v626
        %v628 = vpop.f32.mrf.mxu0
        %629 = vmatprep.mubr.bf16.mxu0 0
        %630 = vmatmul.mubr.bf16.gmra.mxu0 %v528
        %v631 = vpop.f32.mrf.mxu0
        %v632 = vadd.f32 %v499, %v631
        %v633 = vpop.f32.mrf.mxu0
        %v634 = vpop.f32.mrf.mxu0
        %v635 = vadd.f32 %v499, %v634
        %v636 = vpop.f32.mrf.mxu0
        %637 = vmatprep.mubr.bf16.mxu0 0
        %638 = vmatmul.mubr.bf16.gmra.mxu0 %v529
        %v639 = vpop.f32.mrf.mxu0
        %v640 = vadd.f32 %v499, %v639
        %v641 = vpop.f32.mrf.mxu0
        %v642 = vpop.f32.mrf.mxu0
        %v643 = vadd.f32 %v499, %v642
        %v644 = vpop.f32.mrf.mxu0
        %645 = vmatprep.mubr.bf16.mxu0 0
        %646 = vmatmul.mubr.bf16.gmra.mxu0 %v530
        %v647 = vpop.f32.mrf.mxu0
        %v648 = vadd.f32 %v499, %v647
        %v649 = vpop.f32.mrf.mxu0
        %v650 = vpop.f32.mrf.mxu0
        %v651 = vadd.f32 %v499, %v650
        %v652 = vpop.f32.mrf.mxu0
        %653 = vmatprep.mubr.bf16.mxu0 0
        %654 = vmatmul.mubr.bf16.gmra.mxu0 %v531
        %v655 = vpop.f32.mrf.mxu0
        %v656 = vadd.f32 %v499, %v655
        %v657 = vpop.f32.mrf.mxu0
        %v658 = vpop.f32.mrf.mxu0
        %v659 = vadd.f32 %v499, %v658
        %v660 = vpop.f32.mrf.mxu0
        %661 = vmatprep.mubr.bf16.mxu0 0
        %662 = vmatmul.mubr.bf16.gmra.mxu0 %v532
        %v663 = vpop.f32.mrf.mxu0
        %v664 = vadd.f32 %v499, %v663
        %v665 = vpop.f32.mrf.mxu0
        %v666 = vpop.f32.mrf.mxu0
        %v667 = vadd.f32 %v499, %v666
        %v668 = vpop.f32.mrf.mxu0
        %669 = vmatprep.mubr.bf16.mxu0 0
        %670 = vmatmul.mubr.bf16.gmra.mxu0 %v533
        %v671 = vpop.f32.mrf.mxu0
        %v672 = vadd.f32 %v499, %v671
        %v673 = vpop.f32.mrf.mxu0
        %v674 = vpop.f32.mrf.mxu0
        %v675 = vpop.f32.mrf.mxu0
        %676 = vdwg.mxu0
        %v677 = vmax.f32 %v624, 0.0
        %v678 = vmax.f32 %v627, 0.0
        %v679 = vmax.f32 %v632, 0.0
        %v680 = vmax.f32 %v635, 0.0
        %v681 = vmax.f32 %v640, 0.0
        %v682 = vmax.f32 %v643, 0.0
        %v683 = vmax.f32 %v648, 0.0
        %v684 = vmax.f32 %v651, 0.0
        %v685 = vmax.f32 %v656, 0.0
        %v686 = vmax.f32 %v659, 0.0
        %v687 = vmax.f32 %v664, 0.0
        %v688 = vmax.f32 %v667, 0.0
        %v689 = vmax.f32 %v672, 0.0
        %v690 = vpack.c.bf16 %v678, %v677
        %v691 = vpack.c.bf16 %v680, %v679
        %v692 = vpack.c.bf16 %v682, %v681
        %v693 = vpack.c.bf16 %v684, %v683
        %v694 = vpack.c.bf16 %v686, %v685
        %v695 = vpack.c.bf16 %v688, %v687
        %v696 = vpack.c.bf16 %v689, %v689
        %v697 = vld [vmem:[#allocation8] sm:$0xf]
        %v698 = vld [vmem:[#allocation8 + $0x4] sm:$0xf]
        %v699 = vld [vmem:[#allocation8 + $0x8] sm:$0xf]
        %v700 = vld [vmem:[#allocation8 + $0xc] sm:$0xf]
        %v701 = vld [vmem:[#allocation8 + $0x10] sm:$0xf]
        %v702 = vld [vmem:[#allocation8 + $0x14] sm:$0xf]
        %v703 = vld [vmem:[#allocation8 + $0x18] sm:$0xf]
        %v704 = vld [vmem:[#allocation8 + $0x1c] sm:$0xf]
        %v705 = vld [vmem:[#allocation8 + $0x20] sm:$0xf]
        %v706 = vld [vmem:[#allocation8 + $0x24] sm:$0xf]
        %v707 = vld [vmem:[#allocation8 + $0x28] sm:$0xf]
        %v708 = vld [vmem:[#allocation8 + $0x2c] sm:$0xf]
        %v709 = vld [vmem:[#allocation8 + $0x30] sm:$0xf]
        %v710 = vld [vmem:[#allocation8 + $0x34] sm:$0xf]
        %v711 = vld [vmem:[#allocation8 + $0x38] sm:$0xf]
        %v712 = vld [vmem:[#allocation8 + $0x3c] sm:$0xf]
        %v713 = vld [vmem:[%s5] sm:$0x1]
        %v715 = vlaneseq
        %v716 = vshrl.u32 %v715, 7
        %v717 = vsub.s32 0, %v716
        %v718 = vrot.slane %v713, %v717
        %v736 = vunpack.c.l.b16 %v697
        %v737 = vunpack.c.l.b16 %v698
        %v738 = vunpack.c.l.b16 %v699
        %v739 = vunpack.c.l.b16 %v700
        %v740 = vunpack.c.l.b16 %v701
        %v741 = vunpack.c.l.b16 %v702
        %v742 = vunpack.c.l.b16 %v703
        %v743 = vunpack.c.l.b16 %v704
        %v744 = vunpack.c.l.b16 %v705
        %v745 = vunpack.c.l.b16 %v706
        %v746 = vunpack.c.l.b16 %v707
        %v747 = vunpack.c.l.b16 %v708
        %v748 = vunpack.c.l.b16 %v709
        %v749 = vunpack.c.l.b16 %v710
        %v750 = vunpack.c.l.b16 %v711
        %v751 = vunpack.c.l.b16 %v712
        %v752 = vpack.c.b16 %v737, %v736
        %v753 = vpack.c.b16 %v739, %v738
        %v754 = vpack.c.b16 %v741, %v740
        %v755 = vpack.c.b16 %v743, %v742
        %v756 = vpack.c.b16 %v745, %v744
        %v757 = vpack.c.b16 %v747, %v746
        %v758 = vpack.c.b16 %v749, %v748
        %v759 = vpack.c.b16 %v751, %v750
        %768 = vmatprep.subr.bf16.mxu0 0
        %769 = vmatpush1.bf16.msra.mxu0 %v759
        %770 = vmatprep.subr.bf16.mxu0 0
        %771 = vmatpush1.bf16.msra.mxu0 %v758
        %772 = vmatprep.subr.bf16.mxu0 0
        %773 = vmatpush1.bf16.msra.mxu0 %v757
        %774 = vmatprep.subr.bf16.mxu0 0
        %775 = vmatpush1.bf16.msra.mxu0 %v756
        %776 = vmatprep.subr.bf16.mxu0 0
        %777 = vmatpush1.bf16.msra.mxu0 %v755
        %778 = vmatprep.subr.bf16.mxu0 0
        %779 = vmatpush1.bf16.msra.mxu0 %v754
        %780 = vmatprep.subr.bf16.mxu0 0
        %781 = vmatpush1.bf16.msra.mxu0 %v753
        %782 = vmatprep.subr.bf16.mxu0 0
        %783 = vmatpush1.bf16.msra.mxu0 %v752
        %784 = vmatprep.subr.bf16.mxu0 0
        %785 = vmatpush2.bf16.msra.mxu0 0
        %786 = vmatprep.subr.bf16.mxu0 0
        %787 = vmatpush2.bf16.msra.mxu0 0
        %788 = vmatprep.subr.bf16.mxu0 0
        %789 = vmatpush2.bf16.msra.mxu0 0
        %790 = vmatprep.subr.bf16.mxu0 0
        %791 = vmatpush2.bf16.msra.mxu0 0
        %792 = vmatprep.subr.bf16.mxu0 0
        %793 = vmatpush2.bf16.msra.mxu0 0
        %794 = vmatprep.subr.bf16.mxu0 0
        %795 = vmatpush2.bf16.msra.mxu0 0
        %796 = vmatprep.subr.bf16.mxu0 0
        %797 = vmatpush2.bf16.msra.mxu0 0
        %798 = vmatprep.subr.bf16.mxu0 0
        %799 = vmatpush2.bf16.msra.mxu0 0
        %800 = vmatprep.mubr.bf16.mxu0 0
        %801 = vmatmul.mubr.bf16.gmra.mxu0 %v690
        %v802 = vpop.f32.mrf.mxu0
        %v803 = vadd.f32 %v718, %v802
        %v804 = vpop.f32.mrf.mxu0
        %v805 = vpop.f32.mrf.mxu0
        %v806 = vadd.f32 %v718, %v805
        %v807 = vpop.f32.mrf.mxu0
        %808 = vmatprep.mubr.bf16.mxu0 0
        %809 = vmatmul.mubr.bf16.gmra.mxu0 %v691
        %v810 = vpop.f32.mrf.mxu0
        %v811 = vadd.f32 %v718, %v810
        %v812 = vpop.f32.mrf.mxu0
        %v813 = vpop.f32.mrf.mxu0
        %v814 = vadd.f32 %v718, %v813
        %v815 = vpop.f32.mrf.mxu0
        %816 = vmatprep.mubr.bf16.mxu0 0
        %817 = vmatmul.mubr.bf16.gmra.mxu0 %v692
        %v818 = vpop.f32.mrf.mxu0
        %v819 = vadd.f32 %v718, %v818
        %v820 = vpop.f32.mrf.mxu0
        %v821 = vpop.f32.mrf.mxu0
        %v822 = vadd.f32 %v718, %v821
        %v823 = vpop.f32.mrf.mxu0
        %824 = vmatprep.mubr.bf16.mxu0 0
        %825 = vmatmul.mubr.bf16.gmra.mxu0 %v693
        %v826 = vpop.f32.mrf.mxu0
        %v827 = vadd.f32 %v718, %v826
        %v828 = vpop.f32.mrf.mxu0
        %v829 = vpop.f32.mrf.mxu0
        %v830 = vadd.f32 %v718, %v829
        %v831 = vpop.f32.mrf.mxu0
        %832 = vmatprep.mubr.bf16.mxu0 0
        %833 = vmatmul.mubr.bf16.gmra.mxu0 %v694
        %v834 = vpop.f32.mrf.mxu0
        %v835 = vadd.f32 %v718, %v834
        %v836 = vpop.f32.mrf.mxu0
        %v837 = vpop.f32.mrf.mxu0
        %v838 = vadd.f32 %v718, %v837
        %v839 = vpop.f32.mrf.mxu0
        %840 = vmatprep.mubr.bf16.mxu0 0
        %841 = vmatmul.mubr.bf16.gmra.mxu0 %v695
        %v842 = vpop.f32.mrf.mxu0
        %v843 = vadd.f32 %v718, %v842
        %v844 = vpop.f32.mrf.mxu0
        %v845 = vpop.f32.mrf.mxu0
        %v846 = vadd.f32 %v718, %v845
        %v847 = vpop.f32.mrf.mxu0
        %848 = vmatprep.mubr.bf16.mxu0 0
        %849 = vmatmul.mubr.bf16.gmra.mxu0 %v696
        %v850 = vpop.f32.mrf.mxu0
        %v851 = vadd.f32 %v718, %v850
        %v852 = vpop.f32.mrf.mxu0
        %v853 = vpop.f32.mrf.mxu0
        %v854 = vpop.f32.mrf.mxu0
        %855 = vdwg.mxu0
        %v856 = vpack.c.bf16 %v806, %v803
        %v857 = vpack.c.bf16 %v814, %v811
        %v858 = vpack.c.bf16 %v822, %v819
        %v859 = vpack.c.bf16 %v830, %v827
        %v860 = vpack.c.bf16 %v838, %v835
        %v861 = vpack.c.bf16 %v846, %v843
        %v862 = vpack.c.bf16 %v851, %v851
        %v863 = vld [vmem:[%s407] sm:$0xf]
        %v864 = vld [vmem:[%s407 + $0x4] sm:$0xf]
        %v865 = vld [vmem:[%s407 + $0x8] sm:$0xf]
        %v866 = vld [vmem:[%s407 + $0xc] sm:$0xf]
        %v867 = vld [vmem:[%s407 + $0x10] sm:$0xf]
        %v868 = vld [vmem:[%s407 + $0x14] sm:$0xf]
        %v869 = vld [vmem:[%s407 + $0x18] sm:$0xf]
        %v870 = vld [vmem:[%s407 + $0x1c] sm:$0xf]
        %v871 = vld [vmem:[%s407 + $0x20] sm:$0xf]
        %v872 = vld [vmem:[%s407 + $0x24] sm:$0xf]
        %v873 = vld [vmem:[%s407 + $0x28] sm:$0xf]
        %v874 = vld [vmem:[%s407 + $0x2c] sm:$0xf]
        %v875 = vld [vmem:[%s407 + $0x30] sm:$0xf]
        %v889 = vunpack.c.l.b16 %v863
        %v890 = vunpack.c.l.b16 %v864
        %v891 = vunpack.c.l.b16 %v865
        %v892 = vunpack.c.l.b16 %v866
        %v893 = vunpack.c.l.b16 %v867
        %v894 = vunpack.c.l.b16 %v868
        %v895 = vunpack.c.l.b16 %v869
        %v896 = vunpack.c.l.b16 %v870
        %v897 = vunpack.c.l.b16 %v871
        %v898 = vunpack.c.l.b16 %v872
        %v899 = vunpack.c.l.b16 %v873
        %v900 = vunpack.c.l.b16 %v874
        %v901 = vunpack.c.l.b16 %v875
        %v902 = vpack.c.b16 %v890, %v889
        %v903 = vpack.c.b16 %v892, %v891
        %v904 = vpack.c.b16 %v894, %v893
        %v905 = vpack.c.b16 %v896, %v895
        %v906 = vpack.c.b16 %v898, %v897
        %v907 = vpack.c.b16 %v900, %v899
        %v908 = vpack.c.b16 %v901, %v901
        %v916 = vmul.bf16 %v856, %v902
        %v917 = vmul.bf16 %v857, %v903
        %v918 = vmul.bf16 %v858, %v904
        %v919 = vmul.bf16 %v859, %v905
        %v920 = vmul.bf16 %v860, %v906
        %v921 = vmul.bf16 %v861, %v907
        %v922 = vmul.bf16 %v862, %v908
        %v923 = vld [vmem:[#allocation10] sm:$0xf]
        %v924 = vld [vmem:[#allocation10 + $0x4] sm:$0xf]
        %v925 = vld [vmem:[#allocation10 + $0x8] sm:$0xf]
        %v926 = vld [vmem:[#allocation10 + $0xc] sm:$0xf]
        %v927 = vld [vmem:[#allocation10 + $0x10] sm:$0xf]
        %v928 = vld [vmem:[#allocation10 + $0x14] sm:$0xf]
        %v929 = vld [vmem:[#allocation10 + $0x18] sm:$0xf]
        %v930 = vld [vmem:[#allocation10 + $0x1c] sm:$0xf]
        %v931 = vld [vmem:[#allocation10 + $0x20] sm:$0xf]
        %v932 = vld [vmem:[#allocation10 + $0x24] sm:$0xf]
        %v933 = vld [vmem:[#allocation10 + $0x28] sm:$0xf]
        %v934 = vld [vmem:[#allocation10 + $0x2c] sm:$0xf]
        %v935 = vld [vmem:[#allocation10 + $0x30] sm:$0xf]
        %v936 = vld [vmem:[#allocation10 + $0x34] sm:$0xf]
        %v937 = vld [vmem:[#allocation10 + $0x38] sm:$0xf]
        %v938 = vld [vmem:[#allocation10 + $0x3c] sm:$0xf]
        %v955 = vunpack.c.l.b16 %v923
        %v956 = vunpack.c.l.b16 %v924
        %v957 = vunpack.c.l.b16 %v925
        %v958 = vunpack.c.l.b16 %v926
        %v959 = vunpack.c.l.b16 %v927
        %v960 = vunpack.c.l.b16 %v928
        %v961 = vunpack.c.l.b16 %v929
        %v962 = vunpack.c.l.b16 %v930
        %v963 = vunpack.c.l.b16 %v931
        %v964 = vunpack.c.l.b16 %v932
        %v965 = vunpack.c.l.b16 %v933
        %v966 = vunpack.c.l.b16 %v934
        %v967 = vunpack.c.l.b16 %v935
        %v968 = vunpack.c.l.b16 %v936
        %v969 = vunpack.c.l.b16 %v937
        %v970 = vunpack.c.l.b16 %v938
        %v971 = vpack.c.b16 %v956, %v955
        %v972 = vpack.c.b16 %v958, %v957
        %v973 = vpack.c.b16 %v960, %v959
        %v974 = vpack.c.b16 %v962, %v961
        %v975 = vpack.c.b16 %v964, %v963
        %v976 = vpack.c.b16 %v966, %v965
        %v977 = vpack.c.b16 %v968, %v967
        %v978 = vpack.c.b16 %v970, %v969
        %987 = vmatprep.subr.bf16.mxu0 0
        %988 = vmatpush1.bf16.msra.mxu0 %v978
        %989 = vmatprep.subr.bf16.mxu0 0
        %990 = vmatpush1.bf16.msra.mxu0 %v977
        %991 = vmatprep.subr.bf16.mxu0 0
        %992 = vmatpush1.bf16.msra.mxu0 %v976
        %993 = vmatprep.subr.bf16.mxu0 0
        %994 = vmatpush1.bf16.msra.mxu0 %v975
        %995 = vmatprep.subr.bf16.mxu0 0
        %996 = vmatpush1.bf16.msra.mxu0 %v974
        %997 = vmatprep.subr.bf16.mxu0 0
        %998 = vmatpush1.bf16.msra.mxu0 %v973
        %999 = vmatprep.subr.bf16.mxu0 0
        %1000 = vmatpush1.bf16.msra.mxu0 %v972
        %1001 = vmatprep.subr.bf16.mxu0 0
        %1002 = vmatpush1.bf16.msra.mxu0 %v971
        %1003 = vmatprep.subr.bf16.mxu0 0
        %1004 = vmatpush2.bf16.msra.mxu0 0
        %1005 = vmatprep.subr.bf16.mxu0 0
        %1006 = vmatpush2.bf16.msra.mxu0 0
        %1007 = vmatprep.subr.bf16.mxu0 0
        %1008 = vmatpush2.bf16.msra.mxu0 0
        %1009 = vmatprep.subr.bf16.mxu0 0
        %1010 = vmatpush2.bf16.msra.mxu0 0
        %1011 = vmatprep.subr.bf16.mxu0 0
        %1012 = vmatpush2.bf16.msra.mxu0 0
        %1013 = vmatprep.subr.bf16.mxu0 0
        %1014 = vmatpush2.bf16.msra.mxu0 0
        %1015 = vmatprep.subr.bf16.mxu0 0
        %1016 = vmatpush2.bf16.msra.mxu0 0
        %1017 = vmatprep.subr.bf16.mxu0 0
        %1018 = vmatpush2.bf16.msra.mxu0 0
        %1019 = vmatprep.mubr.bf16.mxu0 0
        %1020 = vmatmul.mubr.bf16.gmra.mxu0 %v916
        %v1021 = vpop.f32.mrf.mxu0
        %v1022 = vadd.f32 0.0, %v1021
        %v1023 = vpop.f32.mrf.mxu0
        %v1024 = vpop.f32.mrf.mxu0
        %v1025 = vadd.f32 0.0, %v1024
        %v1026 = vpop.f32.mrf.mxu0
        %1027 = vmatprep.mubr.bf16.mxu0 0
        %1028 = vmatmul.mubr.bf16.gmra.mxu0 %v917
        %v1029 = vpop.f32.mrf.mxu0
        %v1030 = vadd.f32 0.0, %v1029
        %v1031 = vpop.f32.mrf.mxu0
        %v1032 = vpop.f32.mrf.mxu0
        %v1033 = vadd.f32 0.0, %v1032
        %v1034 = vpop.f32.mrf.mxu0
        %1035 = vmatprep.mubr.bf16.mxu0 0
        %1036 = vmatmul.mubr.bf16.gmra.mxu0 %v918
        %v1037 = vpop.f32.mrf.mxu0
        %v1038 = vadd.f32 0.0, %v1037
        %v1039 = vpop.f32.mrf.mxu0
        %v1040 = vpop.f32.mrf.mxu0
        %v1041 = vadd.f32 0.0, %v1040
        %v1042 = vpop.f32.mrf.mxu0
        %1043 = vmatprep.mubr.bf16.mxu0 0
        %1044 = vmatmul.mubr.bf16.gmra.mxu0 %v919
        %v1045 = vpop.f32.mrf.mxu0
        %v1046 = vadd.f32 0.0, %v1045
        %v1047 = vpop.f32.mrf.mxu0
        %v1048 = vpop.f32.mrf.mxu0
        %v1049 = vadd.f32 0.0, %v1048
        %v1050 = vpop.f32.mrf.mxu0
        %1051 = vmatprep.mubr.bf16.mxu0 0
        %1052 = vmatmul.mubr.bf16.gmra.mxu0 %v920
        %v1053 = vpop.f32.mrf.mxu0
        %v1054 = vadd.f32 0.0, %v1053
        %v1055 = vpop.f32.mrf.mxu0
        %v1056 = vpop.f32.mrf.mxu0
        %v1057 = vadd.f32 0.0, %v1056
        %v1058 = vpop.f32.mrf.mxu0
        %1059 = vmatprep.mubr.bf16.mxu0 0
        %1060 = vmatmul.mubr.bf16.gmra.mxu0 %v921
        %v1061 = vpop.f32.mrf.mxu0
        %v1062 = vadd.f32 0.0, %v1061
        %v1063 = vpop.f32.mrf.mxu0
        %v1064 = vpop.f32.mrf.mxu0
        %v1065 = vadd.f32 0.0, %v1064
        %v1066 = vpop.f32.mrf.mxu0
        %1067 = vmatprep.mubr.bf16.mxu0 0
        %1068 = vmatmul.mubr.bf16.gmra.mxu0 %v922
        %v1069 = vpop.f32.mrf.mxu0
        %v1070 = vadd.f32 0.0, %v1069
        %v1071 = vpop.f32.mrf.mxu0
        %v1072 = vpop.f32.mrf.mxu0
        %v1073 = vpop.f32.mrf.mxu0
        %1074 = vdwg.mxu0
        %1075 = vadd.xlane.f32.xlu0 %v1022
        %v1076 = vpop.xlane.xlu0 %1075
        %1077 = vadd.xlane.f32.xlu0 %v1025
        %v1078 = vpop.xlane.xlu0 %1077
        %1079 = vadd.xlane.f32.xlu0 %v1030
        %v1080 = vpop.xlane.xlu0 %1079
        %1081 = vadd.xlane.f32.xlu0 %v1033
        %v1082 = vpop.xlane.xlu0 %1081
        %1083 = vadd.xlane.f32.xlu0 %v1038
        %v1084 = vpop.xlane.xlu0 %1083
        %1085 = vadd.xlane.f32.xlu0 %v1041
        %v1086 = vpop.xlane.xlu0 %1085
        %1087 = vadd.xlane.f32.xlu0 %v1046
        %v1088 = vpop.xlane.xlu0 %1087
        %1089 = vadd.xlane.f32.xlu0 %v1049
        %v1090 = vpop.xlane.xlu0 %1089
        %1091 = vadd.xlane.f32.xlu0 %v1054
        %v1092 = vpop.xlane.xlu0 %1091
        %1093 = vadd.xlane.f32.xlu0 %v1057
        %v1094 = vpop.xlane.xlu0 %1093
        %1095 = vadd.xlane.f32.xlu0 %v1062
        %v1096 = vpop.xlane.xlu0 %1095
        %1097 = vadd.xlane.f32.xlu0 %v1065
        %v1098 = vpop.xlane.xlu0 %1097
        %1099 = vadd.xlane.f32.xlu0 %v1070
        %v1100 = vpop.xlane.xlu0 %1099
        %v1101 = vmul.f32 %v1076, 0.020833334
        %v1102 = vmul.f32 %v1078, 0.020833334
        %v1103 = vmul.f32 %v1080, 0.020833334
        %v1104 = vmul.f32 %v1082, 0.020833334
        %v1105 = vmul.f32 %v1084, 0.020833334
        %v1106 = vmul.f32 %v1086, 0.020833334
        %v1107 = vmul.f32 %v1088, 0.020833334
        %v1108 = vmul.f32 %v1090, 0.020833334
        %v1109 = vmul.f32 %v1092, 0.020833334
        %v1110 = vmul.f32 %v1094, 0.020833334
        %v1111 = vmul.f32 %v1096, 0.020833334
        %v1112 = vmul.f32 %v1098, 0.020833334
        %v1113 = vmul.f32 %v1100, 0.020833334
        %v1114 = vsub.f32 %v1022, %v1101
        %v1115 = vsub.f32 %v1025, %v1102
        %v1116 = vsub.f32 %v1030, %v1103
        %v1117 = vsub.f32 %v1033, %v1104
        %v1118 = vsub.f32 %v1038, %v1105
        %v1119 = vsub.f32 %v1041, %v1106
        %v1120 = vsub.f32 %v1046, %v1107
        %v1121 = vsub.f32 %v1049, %v1108
        %v1122 = vsub.f32 %v1054, %v1109
        %v1123 = vsub.f32 %v1057, %v1110
        %v1124 = vsub.f32 %v1062, %v1111
        %v1125 = vsub.f32 %v1065, %v1112
        %v1126 = vsub.f32 %v1070, %v1113
        %v1127 = vld [vmem:[%s9] sm:$0x1]
        %v1129 = vlaneseq
        %v1130 = vshrl.u32 %v1129, 7
        %v1131 = vsub.s32 0, %v1130
        %v1132 = vrot.slane %v1127, %v1131
        %v1134 = vmul.f32 %v1114, %v1132
        %v1135 = vmul.f32 %v1115, %v1132
        %v1136 = vmul.f32 %v1116, %v1132
        %v1137 = vmul.f32 %v1117, %v1132
        %v1138 = vmul.f32 %v1118, %v1132
        %v1139 = vmul.f32 %v1119, %v1132
        %v1140 = vmul.f32 %v1120, %v1132
        %v1141 = vmul.f32 %v1121, %v1132
        %v1142 = vmul.f32 %v1122, %v1132
        %v1143 = vmul.f32 %v1123, %v1132
        %v1144 = vmul.f32 %v1124, %v1132
        %v1145 = vmul.f32 %v1125, %v1132
        %v1146 = vmul.f32 %v1126, %v1132
        %v1147 = vmul.f32 %v1134, %v1134
        %v1148 = vmul.f32 %v1135, %v1135
        %v1149 = vmul.f32 %v1136, %v1136
        %v1150 = vmul.f32 %v1137, %v1137
        %v1151 = vmul.f32 %v1138, %v1138
        %v1152 = vmul.f32 %v1139, %v1139
        %v1153 = vmul.f32 %v1140, %v1140
        %v1154 = vmul.f32 %v1141, %v1141
        %v1155 = vmul.f32 %v1142, %v1142
        %v1156 = vmul.f32 %v1143, %v1143
        %v1157 = vmul.f32 %v1144, %v1144
        %v1158 = vmul.f32 %v1145, %v1145
        %v1159 = vmul.f32 %v1146, %v1146
        %1160 = vadd.xlane.f32.xlu0 %v1147
        %v1161 = vpop.xlane.xlu0 %1160
        %1162 = vadd.xlane.f32.xlu0 %v1148
        %v1163 = vpop.xlane.xlu0 %1162
        %1164 = vadd.xlane.f32.xlu0 %v1149
        %v1165 = vpop.xlane.xlu0 %1164
        %1166 = vadd.xlane.f32.xlu0 %v1150
        %v1167 = vpop.xlane.xlu0 %1166
        %1168 = vadd.xlane.f32.xlu0 %v1151
        %v1169 = vpop.xlane.xlu0 %1168
        %1170 = vadd.xlane.f32.xlu0 %v1152
        %v1171 = vpop.xlane.xlu0 %1170
        %1172 = vadd.xlane.f32.xlu0 %v1153
        %v1173 = vpop.xlane.xlu0 %1172
        %1174 = vadd.xlane.f32.xlu0 %v1154
        %v1175 = vpop.xlane.xlu0 %1174
        %1176 = vadd.xlane.f32.xlu0 %v1155
        %v1177 = vpop.xlane.xlu0 %1176
        %1178 = vadd.xlane.f32.xlu0 %v1156
        %v1179 = vpop.xlane.xlu0 %1178
        %1180 = vadd.xlane.f32.xlu0 %v1157
        %v1181 = vpop.xlane.xlu0 %1180
        %1182 = vadd.xlane.f32.xlu0 %v1158
        %v1183 = vpop.xlane.xlu0 %1182
        %1184 = vadd.xlane.f32.xlu0 %v1159
        %v1185 = vpop.xlane.xlu0 %1184
        %v1186 = vmul.f32 %v1161, 0.020833334
        %v1187 = vmul.f32 %v1163, 0.020833334
        %v1188 = vmul.f32 %v1165, 0.020833334
        %v1189 = vmul.f32 %v1167, 0.020833334
        %v1190 = vmul.f32 %v1169, 0.020833334
        %v1191 = vmul.f32 %v1171, 0.020833334
        %v1192 = vmul.f32 %v1173, 0.020833334
        %v1193 = vmul.f32 %v1175, 0.020833334
        %v1194 = vmul.f32 %v1177, 0.020833334
        %v1195 = vmul.f32 %v1179, 0.020833334
        %v1196 = vmul.f32 %v1181, 0.020833334
        %v1197 = vmul.f32 %v1183, 0.020833334
        %v1198 = vmul.f32 %v1185, 0.020833334
        %v1199 = vadd.f32 %v1186, 1e-05
        %v1200 = vadd.f32 %v1187, 1e-05
        %v1201 = vadd.f32 %v1188, 1e-05
        %v1202 = vadd.f32 %v1189, 1e-05
        %v1203 = vadd.f32 %v1190, 1e-05
        %v1204 = vadd.f32 %v1191, 1e-05
        %v1205 = vadd.f32 %v1192, 1e-05
        %v1206 = vadd.f32 %v1193, 1e-05
        %v1207 = vadd.f32 %v1194, 1e-05
        %v1208 = vadd.f32 %v1195, 1e-05
        %v1209 = vadd.f32 %v1196, 1e-05
        %v1210 = vadd.f32 %v1197, 1e-05
        %v1211 = vadd.f32 %v1198, 1e-05
        %v1212 = vrsqrt.pop %v1199
        %v1213 = vrsqrt.pop %v1200
        %v1214 = vrsqrt.pop %v1201
        %v1215 = vrsqrt.pop %v1202
        %v1216 = vrsqrt.pop %v1203
        %v1217 = vrsqrt.pop %v1204
        %v1218 = vrsqrt.pop %v1205
        %v1219 = vrsqrt.pop %v1206
        %v1220 = vrsqrt.pop %v1207
        %v1221 = vrsqrt.pop %v1208
        %v1222 = vrsqrt.pop %v1209
        %v1223 = vrsqrt.pop %v1210
        %v1224 = vrsqrt.pop %v1211
        %v1225 = vmul.f32 %v1134, %v1212
        %v1226 = vmul.f32 %v1135, %v1213
        %v1227 = vmul.f32 %v1136, %v1214
        %v1228 = vmul.f32 %v1137, %v1215
        %v1229 = vmul.f32 %v1138, %v1216
        %v1230 = vmul.f32 %v1139, %v1217
        %v1231 = vmul.f32 %v1140, %v1218
        %v1232 = vmul.f32 %v1141, %v1219
        %v1233 = vmul.f32 %v1142, %v1220
        %v1234 = vmul.f32 %v1143, %v1221
        %v1235 = vmul.f32 %v1144, %v1222
        %v1236 = vmul.f32 %v1145, %v1223
        %v1237 = vmul.f32 %v1146, %v1224
        %v1238 = vld [vmem:[%s7] sm:$0x1]
        %v1240 = vlaneseq
        %v1241 = vshrl.u32 %v1240, 7
        %v1242 = vsub.s32 0, %v1241
        %v1243 = vrot.slane %v1238, %v1242
        %v1245 = vmul.f32 %v1225, %v1243
        %v1246 = vmul.f32 %v1226, %v1243
        %v1247 = vmul.f32 %v1227, %v1243
        %v1248 = vmul.f32 %v1228, %v1243
        %v1249 = vmul.f32 %v1229, %v1243
        %v1250 = vmul.f32 %v1230, %v1243
        %v1251 = vmul.f32 %v1231, %v1243
        %v1252 = vmul.f32 %v1232, %v1243
        %v1253 = vmul.f32 %v1233, %v1243
        %v1254 = vmul.f32 %v1234, %v1243
        %v1255 = vmul.f32 %v1235, %v1243
        %v1256 = vmul.f32 %v1236, %v1243
        %v1257 = vmul.f32 %v1237, %v1243
        %v1258 = vld [vmem:[%s8] sm:$0x1]
        %v1260 = vlaneseq
        %v1261 = vshrl.u32 %v1260, 7
        %v1262 = vsub.s32 0, %v1261
        %v1263 = vrot.slane %v1258, %v1262
        %v1265 = vadd.f32 %v1245, %v1263
        %v1266 = vadd.f32 %v1246, %v1263
        %v1267 = vadd.f32 %v1247, %v1263
        %v1268 = vadd.f32 %v1248, %v1263
        %v1269 = vadd.f32 %v1249, %v1263
        %v1270 = vadd.f32 %v1250, %v1263
        %v1271 = vadd.f32 %v1251, %v1263
        %v1272 = vadd.f32 %v1252, %v1263
        %v1273 = vadd.f32 %v1253, %v1263
        %v1274 = vadd.f32 %v1254, %v1263
        %v1275 = vadd.f32 %v1255, %v1263
        %v1276 = vadd.f32 %v1256, %v1263
        %v1277 = vadd.f32 %v1257, %v1263
        %v1278 = vmax.f32 %v1265, 0.0
        %v1279 = vmax.f32 %v1266, 0.0
        %v1280 = vmax.f32 %v1267, 0.0
        %v1281 = vmax.f32 %v1268, 0.0
        %v1282 = vmax.f32 %v1269, 0.0
        %v1283 = vmax.f32 %v1270, 0.0
        %v1284 = vmax.f32 %v1271, 0.0
        %v1285 = vmax.f32 %v1272, 0.0
        %v1286 = vmax.f32 %v1273, 0.0
        %v1287 = vmax.f32 %v1274, 0.0
        %v1288 = vmax.f32 %v1275, 0.0
        %v1289 = vmax.f32 %v1276, 0.0
        %v1290 = vmax.f32 %v1277, 0.0
        %v1291 = vpack.c.bf16 %v1279, %v1278
        %v1292 = vpack.c.bf16 %v1281, %v1280
        %v1293 = vpack.c.bf16 %v1283, %v1282
        %v1294 = vpack.c.bf16 %v1285, %v1284
        %v1295 = vpack.c.bf16 %v1287, %v1286
        %v1296 = vpack.c.bf16 %v1289, %v1288
        %v1297 = vpack.c.bf16 %v1290, %v1290
        %v1305 = vunpack.c.l.b16 %v1291
        %v1306 = vunpack.c.h.b16 %v1291
        %v1307 = vunpack.c.l.b16 %v1292
        %v1308 = vunpack.c.h.b16 %v1292
        %v1309 = vunpack.c.l.b16 %v1293
        %v1310 = vunpack.c.h.b16 %v1293
        %v1311 = vunpack.c.l.b16 %v1294
        %v1312 = vunpack.c.h.b16 %v1294
        %v1313 = vunpack.c.l.b16 %v1295
        %v1314 = vunpack.c.h.b16 %v1295
        %v1315 = vunpack.c.l.b16 %v1296
        %v1316 = vunpack.c.h.b16 %v1296
        %v1317 = vunpack.c.l.b16 %v1297
        %v1318 = vpack.c.b16 %v1305, %v1305
        %v1319 = vpack.c.b16 %v1306, %v1306
        %v1320 = vpack.c.b16 %v1307, %v1307
        %v1321 = vpack.c.b16 %v1308, %v1308
        %v1322 = vpack.c.b16 %v1309, %v1309
        %v1323 = vpack.c.b16 %v1310, %v1310
        %v1324 = vpack.c.b16 %v1311, %v1311
        %v1325 = vpack.c.b16 %v1312, %v1312
        %v1326 = vpack.c.b16 %v1313, %v1313
        %v1327 = vpack.c.b16 %v1314, %v1314
        %v1328 = vpack.c.b16 %v1315, %v1315
        %v1329 = vpack.c.b16 %v1316, %v1316
        %v1330 = vpack.c.b16 %v1317, %v1317
        %1344 = vst [vmem:[%s460] sm:$0xf] %v1318
        %1345 = vst [vmem:[%s460 + $0x4] sm:$0xf] %v1319
        %1346 = vst [vmem:[%s460 + $0x8] sm:$0xf] %v1320
        %1347 = vst [vmem:[%s460 + $0xc] sm:$0xf] %v1321
        %1348 = vst [vmem:[%s460 + $0x10] sm:$0xf] %v1322
        %1349 = vst [vmem:[%s460 + $0x14] sm:$0xf] %v1323
        %1350 = vst [vmem:[%s460 + $0x18] sm:$0xf] %v1324
        %1351 = vst [vmem:[%s460 + $0x1c] sm:$0xf] %v1325
        %1352 = vst [vmem:[%s460 + $0x20] sm:$0xf] %v1326
        %1353 = vst [vmem:[%s460 + $0x24] sm:$0xf] %v1327
        %1354 = vst [vmem:[%s460 + $0x28] sm:$0xf] %v1328
        %1355 = vst [vmem:[%s460 + $0x2c] sm:$0xf] %v1329
        %1356 = vst [vmem:[%s460 + $0x30] sm:$0xf] %v1330
        %s1357 = sand.u32 %s259, 1
        %s1358 = scalar_lea.sflag [#allocation4], %s1357
        %s1359 = sand.u32 %s259, 1
        %s1360 = smul.addr %s1359, 52
        %s1361 = scalar_lea.vmem [#allocation11], %s1360
        // Predicated region
        $region81: #{tpu_custom_call.1} parent=59 // pred_check
          %p1362 = pneg %p269
        $region82: #{tpu_custom_call.1} parent=59 // pred_check_branch
          %1364 = sbr.rel (%p1362) target = $region84
        $region83: #{tpu_custom_call.1} parent=59 // pred_region
          %s1365 = smul.u32 13, %s31
          %s1367 = ssub.s32 832, 832
          %1368 = vsyncadd %s1358, %s1367
          %s1369 = smul.addr %s1365, 64
          %s1370 = scalar_lea.hbm %s10, %s1369
          %s1371 = sshll.u32 %s1361, 4
          %s1372 = int_to_ptr.vmem [resolvable:$true] %s1371
          %1377 = dma.vmem_to_hbm [thread:$0]  %s1372, 832, %s1370, %s1358, 64, 64, 4
        $region84: #{tpu_custom_call.1} parent=59 // pred_fallthru
          _
      $region60: #{tpu_custom_call.1} parent=5 // pred_fallthru
        _
      %p1378 = scmp.le.s32.totalorder 2, %s26
      // Predicated region
      $region85: #{tpu_custom_call.1} parent=5 // pred_check
        %p1379 = pneg %p1378
      $region86: #{tpu_custom_call.1} parent=5 // pred_check_branch
        %1381 = sbr.rel (%p1379) target = $region88
      $region87: #{tpu_custom_call.1} parent=5 // pred_region
        %s1382 = ssub.s32 %s26, 2
        // Predicated region
        $region89: #{tpu_custom_call.1} parent=87 // pred_check
          %p1383 = pneg %p275
        $region90: #{tpu_custom_call.1} parent=87 // pred_check_branch
          %1385 = sbr.rel (%p1383) target = $region92
        $region91: #{tpu_custom_call.1} parent=87 // pred_region
          %s1386 = sand.u32 %s260, 1
          %s1387 = scalar_lea.sflag [#allocation4], %s1386
          %s1388 = sand.u32 %s260, 1
          %s1389 = smul.addr %s1388, 52
          %s1390 = scalar_lea.vmem [#allocation11], %s1389
          %1391 = dma.done %s1387, 832
        $region92: #{tpu_custom_call.1} parent=87 // pred_fallthru
          _
      $region88: #{tpu_custom_call.1} parent=5 // pred_fallthru
        _
    $region6: #{tpu_custom_call.1} parent=1 // loop_footer
      %s30 = sadd.s32 1, %s26
    $region7: #{tpu_custom_call.1} parent=1 // loop_footer_branch
      %25 = sbr.rel target = $region3
    $region8: #{tpu_custom_call.1} parent=1 // loop_exit
      _
    %1392 = vsyncpa [#allocation3], 1
    %s1393 = scalar_lea.sflag [#allocation3], 1
    %1394 = vsyncpa %s1393, 1
    %1395 = vsyncpa [#allocation6], 1
    %s1396 = scalar_lea.sflag [#allocation6], 1
    %1397 = vsyncpa %s1396, 1
    %1398 = vsyncpa [#allocation9], 1
    %1399 = vsyncpa [#allocation4], 1
    %s1400 = scalar_lea.sflag [#allocation4], 1
    %1401 = vsyncpa %s1400, 1

</llo_original>
